<compile_context>
chip_gen: v6e
topology: v6e:2x2x1
jax: 0.10.0
libtpu: 0.0.40
codegen_flags: <defaults>
</compile_context>

<pallas_src>
import functools
import math

import jax
import jax.numpy as jnp
from jax import lax
from jax.experimental import pallas as pl
from jax.experimental.pallas import tpu as pltpu


_SQRT_2_OVER_PI = math.sqrt(2.0 / math.pi)


def _gelu_tanh(x):
    # gelu_pytorch_tanh (SigLIP2 default hidden_act); keep math in f32.
    return 0.5 * x * (1.0 + jnp.tanh(_SQRT_2_OVER_PI * (x + 0.044715 * x * x * x)))


def _layer_norm(x, w, b, eps):
    mean = jnp.mean(x, axis=-1, keepdims=True)
    var = jnp.mean((x - mean) ** 2, axis=-1, keepdims=True)
    return (x - mean) * lax.rsqrt(var + eps) * w + b


# --------------- Kernel 1: LayerNorm1 + fused QKV projection ----------------
def _ln1_qkv_kernel(x_ref, ln1w, ln1b, wq, bq, wk, bk, wv, bv,
                    q_out, k_out, v_out, *, eps, scale):
    x = x_ref[0].astype(jnp.float32)                                # (ts, D)
    h = _layer_norm(x, ln1w[0].astype(jnp.float32),
                    ln1b[0].astype(jnp.float32), eps)
    hc = h.astype(wq.dtype)                       # bf16 MXU operands
    q = jnp.dot(hc, wq[...], preferred_element_type=jnp.float32) \
        + bq[0].astype(jnp.float32)
    k = jnp.dot(hc, wk[...], preferred_element_type=jnp.float32) \
        + bk[0].astype(jnp.float32)
    v = jnp.dot(hc, wv[...], preferred_element_type=jnp.float32) \
        + bv[0].astype(jnp.float32)
    q_out[0] = (q * scale).astype(q_out.dtype)    # fold 1/sqrt(head_dim) into Q
    k_out[0] = k.astype(k_out.dtype)
    v_out[0] = v.astype(v_out.dtype)


# ---- Kernel 2: attention + out_proj + residual + LN2 + MLP + residual ------
def _make_attn_mlp_kernel(*, num_heads, head_dim, eps, mlp_chunks, mask_mode):
    def kernel(*refs):
        if mask_mode == "none":
            (x_ref, q_ref, k_ref, v_ref,
             wo, bo, ln2w, ln2b, w1, b1, w2, b2, out_ref, ctx_scr) = refs
            mask_ref = None
        else:
            (x_ref, q_ref, k_ref, v_ref, mask_ref,
             wo, bo, ln2w, ln2b, w1, b1, w2, b2, out_ref, ctx_scr) = refs

        _, tq, D = x_ref.shape
        cdt = wo.dtype                            # bf16 matmul compute dtype

        q = q_ref[0]                              # (tq, D), 1/sqrt(hd) pre-folded
        k = k_ref[0]                              # (S,  D), lane-dense
        v = v_ref[0]                              # (S,  D)

        if mask_mode == "full":
            mask2d = mask_ref[0, 0].astype(jnp.float32)        # (tq, S)
        elif mask_mode == "kv":
            mask2d = mask_ref[...].astype(jnp.float32)         # (1, S) -> bcast
        else:
            mask2d = None

        # Per-head attention: only one (tq, S) f32 score slab is live at a
        # time; each head's P@V is written into its column slice of a
        # (tq, D) scratch so the output projection is a single K=D GEMM.
        for h in range(num_heads):
            lo = h * head_dim
            qh = q[:, lo:lo + head_dim]
            kh = k[:, lo:lo + head_dim]
            vh = v[:, lo:lo + head_dim]
            s = lax.dot_general(qh, kh, (((1,), (1,)), ((), ())),
                                preferred_element_type=jnp.float32)  # (tq, S)
            if mask2d is not None:
                s = s + mask2d
            m = jnp.max(s, axis=-1, keepdims=True)
            e = jnp.exp(s - m)
            denom = jnp.sum(e, axis=-1, keepdims=True)
            p = e * pl.reciprocal(denom, approx=True)   # divide on the EUP slot
            ctx_scr[:, lo:lo + head_dim] = jnp.dot(
                p.astype(cdt), vh, preferred_element_type=jnp.float32)

        # Output projection: one (tq, D) x (D, D) GEMM (full-depth MXU use).
        attn = jnp.dot(ctx_scr[...].astype(cdt), wo[...],
                       preferred_element_type=jnp.float32)
        attn = attn + bo[0].astype(jnp.float32)

        h1 = x_ref[0].astype(jnp.float32) + attn      # residual 1

        # LayerNorm2 + MLP (fc1 -> gelu -> fc2), blocked over the intermediate
        # dim so only a (tq, chunk) slab of the GELU intermediate is ever live.
        h2 = _layer_norm(h1, ln2w[0].astype(jnp.float32),
                         ln2b[0].astype(jnp.float32), eps)
        h2c = h2.astype(cdt)
        mlp = jnp.zeros((tq, D), jnp.float32)
        for start, size in mlp_chunks:
            t = jnp.dot(h2c, w1[:, start:start + size],
                        preferred_element_type=jnp.float32)
            t = t + b1[0, start:start + size].astype(jnp.float32)
            t = _gelu_tanh(t)
            mlp = mlp + jnp.dot(t.astype(cdt), w2[start:start + size, :],
                                preferred_element_type=jnp.float32)
        mlp = mlp + b2[0].astype(jnp.float32)

        out_ref[0] = (h1 + mlp).astype(out_ref.dtype)  # residual 2

    return kernel


# ------------------------------- wrapper ------------------------------------
def _pick_tile(n, candidates):
    for t in candidates:
        if n % t == 0:
            return t
    return n


def _mlp_chunks(inter, chunk):
    if inter <= chunk:
        return ((0, inter),)
    n, rem = divmod(inter, chunk)
    chunks = [(i * chunk, chunk) for i in range(n)]
    if rem:
        # Fold the non-aligned tail into the previous chunk (avoids masked
        # partial-lane fc1/fc2 stores and keeps GEMM N-dims MXU-aligned).
        chunks[-1] = ((n - 1) * chunk, chunk + rem)
    return tuple(chunks)


def _const_spec(shape, single_buffer):
    idx_map = lambda b, s, _n=len(shape): (0,) * _n
    if single_buffer:
        # Constant-index weight block: never changes across the grid, so a
        # single buffer halves its VMEM residency (matters on v7x's 64 MiB).
        return pl.BlockSpec(shape, idx_map, pipeline_mode=pl.Buffered(1))
    return pl.BlockSpec(shape, idx_map)


def _vmem_limit_bytes():
    try:
        cap = int(pltpu.get_tpu_info().vmem_capacity_bytes)
    except Exception:
        return None  # unknown chip: keep the compiler default scoped limit
    # ~80% of physical VMEM (≈100 MiB on v5e/v6e's 128 MiB, ≈51 MiB on v7x's
    # 64 MiB), leaving headroom for Mosaic internal scratch.
    return min(int(cap * 0.8), 112 * 1024 * 1024)


def _forward(hidden_states, attention_mask, params, num_heads, eps,
             seq_tile_proj, seq_tile_attn, mlp_chunk, compute_dtype,
             single_buffer_weights):
    B, S, D = hidden_states.shape
    inter = params["fc1_w"].shape[1]
    assert D % num_heads == 0
    head_dim = D // num_heads
    scale = head_dim ** -0.5
    cdt = compute_dtype

    # Decoupled seq tiles: projection pass (pure GEMM) wants a big M-dim;
    # attention pass is sized by the (tq, S) softmax-intermediate budget.
    ts1 = seq_tile_proj if seq_tile_proj is not None else \
        _pick_tile(S, (512, 256, 128, 64, 32, 16))
    ts2 = seq_tile_attn if seq_tile_attn is not None else \
        _pick_tile(S, (256, 128, 64, 32, 16))
    assert S % ts1 == 0 and S % ts2 == 0, (S, ts1, ts2)

    # bf16 weights for the MXU (f32 accumulation in-kernel); biases and LN
    # parameters stay f32 since they only feed f32 VPU math.
    wq = params["wq"].astype(cdt)
    wk = params["wk"].astype(cdt)
    wv = params["wv"].astype(cdt)
    wo = params["wo"].astype(cdt)
    w1 = params["fc1_w"].astype(cdt)
    w2 = params["fc2_w"].astype(cdt)
    as_f32 = lambda a: a.astype(jnp.float32)
    bq, bk, bv, bo = (as_f32(params[k]) for k in ("bq", "bk", "bv", "bo"))
    ln1w, ln1b = as_f32(params["ln1_w"]), as_f32(params["ln1_b"])
    ln2w, ln2b = as_f32(params["ln2_w"]), as_f32(params["ln2_b"])
    b1, b2 = as_f32(params["fc1_b"]), as_f32(params["fc2_b"])

    cparams = pltpu.CompilerParams(
        dimension_semantics=("parallel", "parallel"),
        vmem_limit_bytes=_vmem_limit_bytes())

    const = functools.partial(_const_spec, single_buffer=single_buffer_weights)

    # ---- pass 1: LN1 + fused QKV projection, tiled over (batch, seq) ----
    qkv_shape = jax.ShapeDtypeStruct((B, S, D), cdt)   # bf16 Q/K/V halves traffic
    q, k, v = pl.pallas_call(
        functools.partial(_ln1_qkv_kernel, eps=eps, scale=scale),
        out_shape=(qkv_shape, qkv_shape, qkv_shape),
        grid=(B, S // ts1),
        in_specs=[
            pl.BlockSpec((1, ts1, D), lambda b, s: (b, s, 0)),   # x tile
            const((1, D)), const((1, D)),                        # layer_norm1
            const((D, D)), const((1, D)),                        # q_proj
            const((D, D)), const((1, D)),                        # k_proj
            const((D, D)), const((1, D)),                        # v_proj
        ],
        out_specs=(
            pl.BlockSpec((1, ts1, D), lambda b, s: (b, s, 0)),
            pl.BlockSpec((1, ts1, D), lambda b, s: (b, s, 0)),
            pl.BlockSpec((1, ts1, D), lambda b, s: (b, s, 0)),
        ),
        compiler_params=cparams,
    )(hidden_states, ln1w, ln1b, wq, bq, wk, bk, wv, bv)

    # ---- mask handling ----
    if attention_mask is None:
        mask_mode, mask_operand, mask_specs = "none", (), ()
    elif attention_mask.ndim == 2:
        # (B, S) additive key-padding bias: S x less mask HBM traffic than the
        # dense (B, 1, S, S) layout; broadcast over q rows in-kernel.
        mask_mode = "kv"
        mask_operand = (attention_mask,)
        mask_specs = (pl.BlockSpec((1, S), lambda b, s: (b, 0)),)
    else:
        mask_mode = "full"
        mask_operand = (attention_mask,)
        mask_specs = (pl.BlockSpec((1, 1, ts2, S), lambda b, s: (b, 0, s, 0)),)

    # ---- pass 2: attention + out_proj + LN2 + MLP, tiled over (batch, q) ----
    # TODO(synk): at So400m scale on v7x (64 MiB VMEM) fc1/fc2 (and QKV/O)
    # should be streamed from HBM (memory_space=pl.ANY + pltpu.emit_pipeline)
    # per mlp chunk instead of kept VMEM-resident.
    kernel = _make_attn_mlp_kernel(
        num_heads=num_heads, head_dim=head_dim, eps=eps,
        mlp_chunks=_mlp_chunks(inter, mlp_chunk), mask_mode=mask_mode)
    out = pl.pallas_call(
        kernel,
        out_shape=jax.ShapeDtypeStruct((B, S, D), hidden_states.dtype),
        grid=(B, S // ts2),
        in_specs=[
            pl.BlockSpec((1, ts2, D), lambda b, s: (b, s, 0)),   # residual x
            pl.BlockSpec((1, ts2, D), lambda b, s: (b, s, 0)),   # q tile (lane-dense)
            pl.BlockSpec((1, S, D), lambda b, s: (b, 0, 0)),     # k (full, per batch)
            pl.BlockSpec((1, S, D), lambda b, s: (b, 0, 0)),     # v (full, per batch)
            *mask_specs,                                         # additive mask
            const((D, D)), const((1, D)),                        # out_proj
            const((1, D)), const((1, D)),                        # layer_norm2
            const((D, inter)), const((1, inter)),                # fc1
            const((inter, D)), const((1, D)),                    # fc2
        ],
        out_specs=pl.BlockSpec((1, ts2, D), lambda b, s: (b, s, 0)),
        scratch_shapes=[pltpu.VMEM((ts2, D), jnp.float32)],      # per-head ctx
        compiler_params=cparams,
    )(hidden_states, q, k, v, *mask_operand,
      wo, bo, ln2w, ln2b, w1, b1, w2, b2)
    return out


def siglip2_encoder_layer(hidden_states, attention_mask, params, num_heads,
                          eps=1e-6, seq_tile_proj=None, seq_tile_attn=None,
                          mlp_chunk=512, compute_dtype=jnp.bfloat16,
                          single_buffer_weights=True):
    try:
        return _forward(hidden_states, attention_mask, params, num_heads, eps,
                        seq_tile_proj, seq_tile_attn, mlp_chunk, compute_dtype,
                        single_buffer_weights)
    except Exception:
        if not single_buffer_weights:
            raise
        # pl.Buffered(1) on constant-index blocks isn't honored by every jax
        # lowering path; retry with default (double-buffered) weight blocks.
        # A genuine kernel bug would still raise from this second attempt.
        return _forward(hidden_states, attention_mask, params, num_heads, eps,
                        seq_tile_proj, seq_tile_attn, mlp_chunk, compute_dtype,
                        single_buffer_weights=False)


# ------------------------------ reference -----------------------------------
def reference_layer(hidden_states, attention_mask, params, num_heads, eps=1e-6):
    """Pure-JAX f32 reference mirroring the PyTorch forward (eager attention)."""
    B, S, D = hidden_states.shape
    head_dim = D // num_heads
    scale = head_dim ** -0.5

    def ln(x, w, b):
        mu = x.mean(-1, keepdims=True)
        var = ((x - mu) ** 2).mean(-1, keepdims=True)
        return (x - mu) / jnp.sqrt(var + eps) * w + b

    residual = hidden_states
    h = ln(hidden_states, params["ln1_w"][0], params["ln1_b"][0])
    q = h @ params["wq"] + params["bq"][0]
    k = h @ params["wk"] + params["bk"][0]
    v = h @ params["wv"] + params["bv"][0]
    q = q.reshape(B, S, num_heads, head_dim).transpose(0, 2, 1, 3)
    k = k.reshape(B, S, num_heads, head_dim).transpose(0, 2, 1, 3)
    v = v.reshape(B, S, num_heads, head_dim).transpose(0, 2, 1, 3)
    scores = jnp.einsum("bhqd,bhkd->bhqk", q, k) * scale + attention_mask
    probs = jax.nn.softmax(scores.astype(jnp.float32), axis=-1)
    attn = jnp.einsum("bhqk,bhkd->bhqd", probs, v)
    attn = attn.transpose(0, 2, 1, 3).reshape(B, S, D)
    attn = attn @ params["wo"] + params["bo"][0]
    h = residual + attn

    residual = h
    m = ln(h, params["ln2_w"][0], params["ln2_b"][0])
    m = m @ params["fc1_w"] + params["fc1_b"][0]
    m = _gelu_tanh(m)
    m = m @ params["fc2_w"] + params["fc2_b"][0]
    return residual + m


if __name__ == "__main__":
    # Small config consistent with the module's forward.
    B, S, D = 2, 32, 32
    num_heads, inter = 2, 64
    eps = 1e-6

    key = jax.random.PRNGKey(0)
    ks = jax.random.split(key, 16)

    def rnd(k, shape, scale=0.02):
        return (scale * jax.random.normal(k, shape)).astype(jnp.float32)

    params = {
        "wq": rnd(ks[0], (D, D)), "bq": rnd(ks[1], (1, D)),
        "wk": rnd(ks[2], (D, D)), "bk": rnd(ks[3], (1, D)),
        "wv": rnd(ks[4], (D, D)), "bv": rnd(ks[5], (1, D)),
        "wo": rnd(ks[6], (D, D)), "bo": rnd(ks[7], (1, D)),
        "ln1_w": jnp.ones((1, D), jnp.float32),
        "ln1_b": jnp.zeros((1, D), jnp.float32),
        "ln2_w": jnp.ones((1, D), jnp.float32),
        "ln2_b": jnp.zeros((1, D), jnp.float32),
        "fc1_w": rnd(ks[8], (D, inter)), "fc1_b": rnd(ks[9], (1, inter)),
        "fc2_w": rnd(ks[10], (inter, D)), "fc2_b": rnd(ks[11], (1, D)),
    }

    hidden_states = jax.random.normal(ks[12], (B, S, D), jnp.float32)

    # PyTorch-layout additive mask (B, 1, S, S): mask the last key of batch 1.
    attention_mask = jnp.zeros((B, 1, S, S), jnp.float32)
    attention_mask = attention_mask.at[1, :, :, -1].set(-1e9)
    # Equivalent key-padding vector for the optimized (B, S) fast path.
    kv_mask = jnp.zeros((B, S), jnp.float32).at[1, -1].set(-1e9)

    # seq tiles 16 / mlp_chunk 32 deliberately exercise the multi-tile and
    # intermediate-chunking code paths at this toy size (bf16-safe tiles).
    out = siglip2_encoder_layer(hidden_states, attention_mask, params,
                                num_heads=num_heads, eps=eps,
                                seq_tile_proj=16, seq_tile_attn=16,
                                mlp_chunk=32)
    out = jax.block_until_ready(out)

    ref = reference_layer(hidden_states, attention_mask, params,
                          num_heads=num_heads, eps=eps)
    assert out.shape == (B, S, D)
    err = float(jnp.max(jnp.abs(out - ref)))
    # Tolerance covers bf16 GEMM operands + approximate-reciprocal softmax.
    assert err < 1e-2, err

    # Key-padding fast-path mask must agree with the dense-mask reference.
    out_kv = siglip2_encoder_layer(hidden_states, kv_mask, params,
                                   num_heads=num_heads, eps=eps,
                                   seq_tile_proj=16, seq_tile_attn=16,
                                   mlp_chunk=32)
    out_kv = jax.block_until_ready(out_kv)
    err_kv = float(jnp.max(jnp.abs(out_kv - ref)))
    assert err_kv < 1e-2, err_kv

    print("KERNEL_OK")
</pallas_src>

<mosaic_0001>
module attributes {stable_mosaic.version = 11 : i64} {
  func.func @_ln1_qkv_kernel(%arg0: i32, %arg1: i32, %arg2: memref<1x16x32xf32, #tpu.memory_space<vmem>>, %arg3: memref<1x32xf32, #tpu.memory_space<vmem>>, %arg4: memref<1x32xf32, #tpu.memory_space<vmem>>, %arg5: memref<32x32xbf16, #tpu.memory_space<vmem>>, %arg6: memref<1x32xf32, #tpu.memory_space<vmem>>, %arg7: memref<32x32xbf16, #tpu.memory_space<vmem>>, %arg8: memref<1x32xf32, #tpu.memory_space<vmem>>, %arg9: memref<32x32xbf16, #tpu.memory_space<vmem>>, %arg10: memref<1x32xf32, #tpu.memory_space<vmem>>, %arg11: memref<1x16x32xbf16, #tpu.memory_space<vmem>>, %arg12: memref<1x16x32xbf16, #tpu.memory_space<vmem>>, %arg13: memref<1x16x32xbf16, #tpu.memory_space<vmem>>) attributes {dimension_semantics = [#tpu.dimension_semantics<parallel>, #tpu.dimension_semantics<parallel>], iteration_bounds = array<i64: 2, 2>, scalar_prefetch = 0 : i64, scratch_operands = 0 : i64, tpu.core_type = #tpu.core_type<tc>, window_params = [{transform_indices = @transform_0, window_bounds = array<i64: 1, 16, 32>}, {pipeline_mode = #tpu.pipeline_mode<synchronous>, transform_indices = @transform_1, window_bounds = array<i64: 1, 32>}, {pipeline_mode = #tpu.pipeline_mode<synchronous>, transform_indices = @transform_2, window_bounds = array<i64: 1, 32>}, {pipeline_mode = #tpu.pipeline_mode<synchronous>, transform_indices = @transform_3, window_bounds = array<i64: 32, 32>}, {pipeline_mode = #tpu.pipeline_mode<synchronous>, transform_indices = @transform_4, window_bounds = array<i64: 1, 32>}, {pipeline_mode = #tpu.pipeline_mode<synchronous>, transform_indices = @transform_5, window_bounds = array<i64: 32, 32>}, {pipeline_mode = #tpu.pipeline_mode<synchronous>, transform_indices = @transform_6, window_bounds = array<i64: 1, 32>}, {pipeline_mode = #tpu.pipeline_mode<synchronous>, transform_indices = @transform_7, window_bounds = array<i64: 32, 32>}, {pipeline_mode = #tpu.pipeline_mode<synchronous>, transform_indices = @transform_8, window_bounds = array<i64: 1, 32>}, {transform_indices = @transform_9, window_bounds = array<i64: 1, 16, 32>}, {transform_indices = @transform_10, window_bounds = array<i64: 1, 16, 32>}, {transform_indices = @transform_11, window_bounds = array<i64: 1, 16, 32>}]} {
    %c0 = arith.constant 0 : index
    %c0_0 = arith.constant 0 : index
    %c0_1 = arith.constant 0 : index
    %0 = vector.load %arg2[%c0, %c0_0, %c0_1] : memref<1x16x32xf32, #tpu.memory_space<vmem>>, vector<1x16x32xf32>
    %1 = vector.shape_cast %0 : vector<1x16x32xf32> to vector<16x32xf32>
    %c0_2 = arith.constant 0 : index
    %c0_3 = arith.constant 0 : index
    %2 = vector.load %arg3[%c0_2, %c0_3] : memref<1x32xf32, #tpu.memory_space<vmem>>, vector<1x32xf32>
    %3 = vector.shape_cast %2 : vector<1x32xf32> to vector<32xf32>
    %c0_4 = arith.constant 0 : index
    %c0_5 = arith.constant 0 : index
    %4 = vector.load %arg4[%c0_4, %c0_5] : memref<1x32xf32, #tpu.memory_space<vmem>>, vector<1x32xf32>
    %5 = vector.shape_cast %4 : vector<1x32xf32> to vector<32xf32>
    %cst = arith.constant dense<0.000000e+00> : vector<16xf32>
    %6 = vector.multi_reduction <add>, %1, %cst [1] : vector<16x32xf32> to vector<16xf32>
    %7 = vector.shape_cast %6 : vector<16xf32> to vector<16x1xf32>
    %cst_6 = arith.constant 3.200000e+01 : f32
    %8 = vector.broadcast %cst_6 : f32 to vector<16x1xf32>
    %9 = arith.divf %7, %8 : vector<16x1xf32>
    %10 = vector.broadcast %9 : vector<16x1xf32> to vector<16x32xf32>
    %11 = arith.subf %1, %10 : vector<16x32xf32>
    %12 = arith.mulf %11, %11 : vector<16x32xf32>
    %cst_7 = arith.constant dense<0.000000e+00> : vector<16xf32>
    %13 = vector.multi_reduction <add>, %12, %cst_7 [1] : vector<16x32xf32> to vector<16xf32>
    %14 = vector.shape_cast %13 : vector<16xf32> to vector<16x1xf32>
    %cst_8 = arith.constant 3.200000e+01 : f32
    %15 = vector.broadcast %cst_8 : f32 to vector<16x1xf32>
    %16 = arith.divf %14, %15 : vector<16x1xf32>
    %17 = vector.broadcast %9 : vector<16x1xf32> to vector<16x32xf32>
    %18 = arith.subf %1, %17 : vector<16x32xf32>
    %cst_9 = arith.constant 9.99999997E-7 : f32
    %19 = vector.broadcast %cst_9 : f32 to vector<16x1xf32>
    %20 = arith.addf %16, %19 : vector<16x1xf32>
    %21 = math.rsqrt %20 : vector<16x1xf32>
    %22 = vector.broadcast %21 : vector<16x1xf32> to vector<16x32xf32>
    %23 = arith.mulf %18, %22 : vector<16x32xf32>
    %24 = vector.shape_cast %3 : vector<32xf32> to vector<1x32xf32>
    %25 = vector.broadcast %24 : vector<1x32xf32> to vector<16x32xf32>
    %26 = arith.mulf %23, %25 : vector<16x32xf32>
    %27 = vector.shape_cast %5 : vector<32xf32> to vector<1x32xf32>
    %28 = vector.broadcast %27 : vector<1x32xf32> to vector<16x32xf32>
    %29 = arith.addf %26, %28 : vector<16x32xf32>
    %30 = arith.truncf %29 : vector<16x32xf32> to vector<16x32xbf16>
    %c0_10 = arith.constant 0 : index
    %c0_11 = arith.constant 0 : index
    %31 = vector.load %arg5[%c0_10, %c0_11] : memref<32x32xbf16, #tpu.memory_space<vmem>>, vector<32x32xbf16>
    %cst_12 = arith.constant dense<0.000000e+00> : vector<16x32xf32>
    %32 = tpu.matmul %30, %31, %cst_12 {dimension_numbers = #tpu.dot_dimension_numbers<[1], [0], [0], [1], [0, 0, 1, 1], [], []>} : vector<16x32xbf16>, vector<32x32xbf16>, vector<16x32xf32> -> vector<16x32xf32>
    %c0_13 = arith.constant 0 : index
    %c0_14 = arith.constant 0 : index
    %33 = vector.load %arg6[%c0_13, %c0_14] : memref<1x32xf32, #tpu.memory_space<vmem>>, vector<1x32xf32>
    %34 = vector.shape_cast %33 : vector<1x32xf32> to vector<32xf32>
    %35 = vector.shape_cast %34 : vector<32xf32> to vector<1x32xf32>
    %36 = vector.broadcast %35 : vector<1x32xf32> to vector<16x32xf32>
    %37 = arith.addf %32, %36 : vector<16x32xf32>
    %c0_15 = arith.constant 0 : index
    %c0_16 = arith.constant 0 : index
    %38 = vector.load %arg7[%c0_15, %c0_16] : memref<32x32xbf16, #tpu.memory_space<vmem>>, vector<32x32xbf16>
    %cst_17 = arith.constant dense<0.000000e+00> : vector<16x32xf32>
    %39 = tpu.matmul %30, %38, %cst_17 {dimension_numbers = #tpu.dot_dimension_numbers<[1], [0], [0], [1], [0, 0, 1, 1], [], []>} : vector<16x32xbf16>, vector<32x32xbf16>, vector<16x32xf32> -> vector<16x32xf32>
    %c0_18 = arith.constant 0 : index
    %c0_19 = arith.constant 0 : index
    %40 = vector.load %arg8[%c0_18, %c0_19] : memref<1x32xf32, #tpu.memory_space<vmem>>, vector<1x32xf32>
    %41 = vector.shape_cast %40 : vector<1x32xf32> to vector<32xf32>
    %42 = vector.shape_cast %41 : vector<32xf32> to vector<1x32xf32>
    %43 = vector.broadcast %42 : vector<1x32xf32> to vector<16x32xf32>
    %44 = arith.addf %39, %43 : vector<16x32xf32>
    %c0_20 = arith.constant 0 : index
    %c0_21 = arith.constant 0 : index
    %45 = vector.load %arg9[%c0_20, %c0_21] : memref<32x32xbf16, #tpu.memory_space<vmem>>, vector<32x32xbf16>
    %cst_22 = arith.constant dense<0.000000e+00> : vector<16x32xf32>
    %46 = tpu.matmul %30, %45, %cst_22 {dimension_numbers = #tpu.dot_dimension_numbers<[1], [0], [0], [1], [0, 0, 1, 1], [], []>} : vector<16x32xbf16>, vector<32x32xbf16>, vector<16x32xf32> -> vector<16x32xf32>
    %c0_23 = arith.constant 0 : index
    %c0_24 = arith.constant 0 : index
    %47 = vector.load %arg10[%c0_23, %c0_24] : memref<1x32xf32, #tpu.memory_space<vmem>>, vector<1x32xf32>
    %48 = vector.shape_cast %47 : vector<1x32xf32> to vector<32xf32>
    %49 = vector.shape_cast %48 : vector<32xf32> to vector<1x32xf32>
    %50 = vector.broadcast %49 : vector<1x32xf32> to vector<16x32xf32>
    %51 = arith.addf %46, %50 : vector<16x32xf32>
    %cst_25 = arith.constant 2.500000e-01 : f32
    %52 = vector.broadcast %cst_25 : f32 to vector<16x32xf32>
    %53 = arith.mulf %37, %52 : vector<16x32xf32>
    %54 = arith.truncf %53 : vector<16x32xf32> to vector<16x32xbf16>
    %c0_26 = arith.constant 0 : index
    %c0_27 = arith.constant 0 : index
    %c0_28 = arith.constant 0 : index
    %55 = vector.load %arg11[%c0_26, %c0_27, %c0_28] : memref<1x16x32xbf16, #tpu.memory_space<vmem>>, vector<1x16x32xbf16>
    %56 = vector.shape_cast %55 : vector<1x16x32xbf16> to vector<16x32xbf16>
    %57 = vector.shape_cast %54 : vector<16x32xbf16> to vector<1x16x32xbf16>
    tpu.vector_store %arg11[%c0_26, %c0_27, %c0_28], %57 {strides = array<i32>} : memref<1x16x32xbf16, #tpu.memory_space<vmem>>, vector<1x16x32xbf16>,
    %58 = arith.truncf %44 : vector<16x32xf32> to vector<16x32xbf16>
    %c0_29 = arith.constant 0 : index
    %c0_30 = arith.constant 0 : index
    %c0_31 = arith.constant 0 : index
    %59 = vector.load %arg12[%c0_29, %c0_30, %c0_31] : memref<1x16x32xbf16, #tpu.memory_space<vmem>>, vector<1x16x32xbf16>
    %60 = vector.shape_cast %59 : vector<1x16x32xbf16> to vector<16x32xbf16>
    %61 = vector.shape_cast %58 : vector<16x32xbf16> to vector<1x16x32xbf16>
    tpu.vector_store %arg12[%c0_29, %c0_30, %c0_31], %61 {strides = array<i32>} : memref<1x16x32xbf16, #tpu.memory_space<vmem>>, vector<1x16x32xbf16>,
    %62 = arith.truncf %51 : vector<16x32xf32> to vector<16x32xbf16>
    %c0_32 = arith.constant 0 : index
    %c0_33 = arith.constant 0 : index
    %c0_34 = arith.constant 0 : index
    %63 = vector.load %arg13[%c0_32, %c0_33, %c0_34] : memref<1x16x32xbf16, #tpu.memory_space<vmem>>, vector<1x16x32xbf16>
    %64 = vector.shape_cast %63 : vector<1x16x32xbf16> to vector<16x32xbf16>
    %65 = vector.shape_cast %62 : vector<16x32xbf16> to vector<1x16x32xbf16>
    tpu.vector_store %arg13[%c0_32, %c0_33, %c0_34], %65 {strides = array<i32>} : memref<1x16x32xbf16, #tpu.memory_space<vmem>>, vector<1x16x32xbf16>,
    return
  }
  func.func @transform_0(%arg0: i32, %arg1: i32) -> (i32, i32, i32) {
    %c0_i32 = arith.constant 0 : i32
    %c0_i32_0 = arith.constant 0 : i32
    return %arg0, %arg1, %c0_i32 : i32, i32, i32
  }
  func.func @transform_1(%arg0: i32, %arg1: i32) -> (i32, i32) {
    %c0_i32 = arith.constant 0 : i32
    %c0_i32_0 = arith.constant 0 : i32
    %c0_i32_1 = arith.constant 0 : i32
    return %c0_i32, %c0_i32_0 : i32, i32
  }
  func.func @transform_2(%arg0: i32, %arg1: i32) -> (i32, i32) {
    %c0_i32 = arith.constant 0 : i32
    %c0_i32_0 = arith.constant 0 : i32
    %c0_i32_1 = arith.constant 0 : i32
    return %c0_i32, %c0_i32_0 : i32, i32
  }
  func.func @transform_3(%arg0: i32, %arg1: i32) -> (i32, i32) {
    %c0_i32 = arith.constant 0 : i32
    %c0_i32_0 = arith.constant 0 : i32
    %c0_i32_1 = arith.constant 0 : i32
    return %c0_i32, %c0_i32_0 : i32, i32
  }
  func.func @transform_4(%arg0: i32, %arg1: i32) -> (i32, i32) {
    %c0_i32 = arith.constant 0 : i32
    %c0_i32_0 = arith.constant 0 : i32
    %c0_i32_1 = arith.constant 0 : i32
    return %c0_i32, %c0_i32_0 : i32, i32
  }
  func.func @transform_5(%arg0: i32, %arg1: i32) -> (i32, i32) {
    %c0_i32 = arith.constant 0 : i32
    %c0_i32_0 = arith.constant 0 : i32
    %c0_i32_1 = arith.constant 0 : i32
    return %c0_i32, %c0_i32_0 : i32, i32
  }
  func.func @transform_6(%arg0: i32, %arg1: i32) -> (i32, i32) {
    %c0_i32 = arith.constant 0 : i32
    %c0_i32_0 = arith.constant 0 : i32
    %c0_i32_1 = arith.constant 0 : i32
    return %c0_i32, %c0_i32_0 : i32, i32
  }
  func.func @transform_7(%arg0: i32, %arg1: i32) -> (i32, i32) {
    %c0_i32 = arith.constant 0 : i32
    %c0_i32_0 = arith.constant 0 : i32
    %c0_i32_1 = arith.constant 0 : i32
    return %c0_i32, %c0_i32_0 : i32, i32
  }
  func.func @transform_8(%arg0: i32, %arg1: i32) -> (i32, i32) {
    %c0_i32 = arith.constant 0 : i32
    %c0_i32_0 = arith.constant 0 : i32
    %c0_i32_1 = arith.constant 0 : i32
    return %c0_i32, %c0_i32_0 : i32, i32
  }
  func.func @transform_9(%arg0: i32, %arg1: i32) -> (i32, i32, i32) {
    %c0_i32 = arith.constant 0 : i32
    %c0_i32_0 = arith.constant 0 : i32
    return %arg0, %arg1, %c0_i32 : i32, i32, i32
  }
  func.func @transform_10(%arg0: i32, %arg1: i32) -> (i32, i32, i32) {
    %c0_i32 = arith.constant 0 : i32
    %c0_i32_0 = arith.constant 0 : i32
    return %arg0, %arg1, %c0_i32 : i32, i32, i32
  }
  func.func @transform_11(%arg0: i32, %arg1: i32) -> (i32, i32, i32) {
    %c0_i32 = arith.constant 0 : i32
    %c0_i32_0 = arith.constant 0 : i32
    return %arg0, %arg1, %c0_i32 : i32, i32, i32
  }
}

module attributes {stable_mosaic.version = 11 : i64} {
  func.func @_ln1_qkv_kernel(%arg0: i32, %arg1: i32, %arg2: memref<1x16x32xf32, #tpu.memory_space<vmem>>, %arg3: memref<1x32xf32, #tpu.memory_space<vmem>>, %arg4: memref<1x32xf32, #tpu.memory_space<vmem>>, %arg5: memref<32x32xbf16, #tpu.memory_space<vmem>>, %arg6: memref<1x32xf32, #tpu.memory_space<vmem>>, %arg7: memref<32x32xbf16, #tpu.memory_space<vmem>>, %arg8: memref<1x32xf32, #tpu.memory_space<vmem>>, %arg9: memref<32x32xbf16, #tpu.memory_space<vmem>>, %arg10: memref<1x32xf32, #tpu.memory_space<vmem>>, %arg11: memref<1x16x32xbf16, #tpu.memory_space<vmem>>, %arg12: memref<1x16x32xbf16, #tpu.memory_space<vmem>>, %arg13: memref<1x16x32xbf16, #tpu.memory_space<vmem>>) attributes {dimension_semantics = [#tpu.dimension_semantics<parallel>, #tpu.dimension_semantics<parallel>], iteration_bounds = array<i64: 2, 2>, scalar_prefetch = 0 : i64, scratch_operands = 0 : i64, tpu.core_type = #tpu.core_type<tc>, window_params = [{transform_indices = @transform_0, window_bounds = array<i64: 1, 16, 32>}, {pipeline_mode = #tpu.pipeline_mode<synchronous>, transform_indices = @transform_1, window_bounds = array<i64: 1, 32>}, {pipeline_mode = #tpu.pipeline_mode<synchronous>, transform_indices = @transform_2, window_bounds = array<i64: 1, 32>}, {pipeline_mode = #tpu.pipeline_mode<synchronous>, transform_indices = @transform_3, window_bounds = array<i64: 32, 32>}, {pipeline_mode = #tpu.pipeline_mode<synchronous>, transform_indices = @transform_4, window_bounds = array<i64: 1, 32>}, {pipeline_mode = #tpu.pipeline_mode<synchronous>, transform_indices = @transform_5, window_bounds = array<i64: 32, 32>}, {pipeline_mode = #tpu.pipeline_mode<synchronous>, transform_indices = @transform_6, window_bounds = array<i64: 1, 32>}, {pipeline_mode = #tpu.pipeline_mode<synchronous>, transform_indices = @transform_7, window_bounds = array<i64: 32, 32>}, {pipeline_mode = #tpu.pipeline_mode<synchronous>, transform_indices = @transform_8, window_bounds = array<i64: 1, 32>}, {transform_indices = @transform_9, window_bounds = array<i64: 1, 16, 32>}, {transform_indices = @transform_10, window_bounds = array<i64: 1, 16, 32>}, {transform_indices = @transform_11, window_bounds = array<i64: 1, 16, 32>}]} {
    %c0 = arith.constant 0 : index
    %c0_0 = arith.constant 0 : index
    %c0_1 = arith.constant 0 : index
    %0 = vector.load %arg2[%c0, %c0_0, %c0_1] : memref<1x16x32xf32, #tpu.memory_space<vmem>>, vector<1x16x32xf32>
    %1 = vector.shape_cast %0 : vector<1x16x32xf32> to vector<16x32xf32>
    %c0_2 = arith.constant 0 : index
    %c0_3 = arith.constant 0 : index
    %2 = vector.load %arg3[%c0_2, %c0_3] : memref<1x32xf32, #tpu.memory_space<vmem>>, vector<1x32xf32>
    %3 = vector.shape_cast %2 : vector<1x32xf32> to vector<32xf32>
    %c0_4 = arith.constant 0 : index
    %c0_5 = arith.constant 0 : index
    %4 = vector.load %arg4[%c0_4, %c0_5] : memref<1x32xf32, #tpu.memory_space<vmem>>, vector<1x32xf32>
    %5 = vector.shape_cast %4 : vector<1x32xf32> to vector<32xf32>
    %cst = arith.constant dense<0.000000e+00> : vector<16xf32>
    %6 = vector.multi_reduction <add>, %1, %cst [1] : vector<16x32xf32> to vector<16xf32>
    %7 = vector.shape_cast %6 : vector<16xf32> to vector<16x1xf32>
    %cst_6 = arith.constant 3.200000e+01 : f32
    %8 = vector.broadcast %cst_6 : f32 to vector<16x1xf32>
    %9 = arith.divf %7, %8 : vector<16x1xf32>
    %10 = vector.broadcast %9 : vector<16x1xf32> to vector<16x32xf32>
    %11 = arith.subf %1, %10 : vector<16x32xf32>
    %12 = arith.mulf %11, %11 : vector<16x32xf32>
    %cst_7 = arith.constant dense<0.000000e+00> : vector<16xf32>
    %13 = vector.multi_reduction <add>, %12, %cst_7 [1] : vector<16x32xf32> to vector<16xf32>
    %14 = vector.shape_cast %13 : vector<16xf32> to vector<16x1xf32>
    %cst_8 = arith.constant 3.200000e+01 : f32
    %15 = vector.broadcast %cst_8 : f32 to vector<16x1xf32>
    %16 = arith.divf %14, %15 : vector<16x1xf32>
    %17 = vector.broadcast %9 : vector<16x1xf32> to vector<16x32xf32>
    %18 = arith.subf %1, %17 : vector<16x32xf32>
    %cst_9 = arith.constant 9.99999997E-7 : f32
    %19 = vector.broadcast %cst_9 : f32 to vector<16x1xf32>
    %20 = arith.addf %16, %19 : vector<16x1xf32>
    %21 = math.rsqrt %20 : vector<16x1xf32>
    %22 = vector.broadcast %21 : vector<16x1xf32> to vector<16x32xf32>
    %23 = arith.mulf %18, %22 : vector<16x32xf32>
    %24 = vector.shape_cast %3 : vector<32xf32> to vector<1x32xf32>
    %25 = vector.broadcast %24 : vector<1x32xf32> to vector<16x32xf32>
    %26 = arith.mulf %23, %25 : vector<16x32xf32>
    %27 = vector.shape_cast %5 : vector<32xf32> to vector<1x32xf32>
    %28 = vector.broadcast %27 : vector<1x32xf32> to vector<16x32xf32>
    %29 = arith.addf %26, %28 : vector<16x32xf32>
    %30 = arith.truncf %29 : vector<16x32xf32> to vector<16x32xbf16>
    %c0_10 = arith.constant 0 : index
    %c0_11 = arith.constant 0 : index
    %31 = vector.load %arg5[%c0_10, %c0_11] : memref<32x32xbf16, #tpu.memory_space<vmem>>, vector<32x32xbf16>
    %cst_12 = arith.constant dense<0.000000e+00> : vector<16x32xf32>
    %32 = tpu.matmul %30, %31, %cst_12 {dimension_numbers = #tpu.dot_dimension_numbers<[1], [0], [0], [1], [0, 0, 1, 1], [], []>} : vector<16x32xbf16>, vector<32x32xbf16>, vector<16x32xf32> -> vector<16x32xf32>
    %c0_13 = arith.constant 0 : index
    %c0_14 = arith.constant 0 : index
    %33 = vector.load %arg6[%c0_13, %c0_14] : memref<1x32xf32, #tpu.memory_space<vmem>>, vector<1x32xf32>
    %34 = vector.shape_cast %33 : vector<1x32xf32> to vector<32xf32>
    %35 = vector.shape_cast %34 : vector<32xf32> to vector<1x32xf32>
    %36 = vector.broadcast %35 : vector<1x32xf32> to vector<16x32xf32>
    %37 = arith.addf %32, %36 : vector<16x32xf32>
    %c0_15 = arith.constant 0 : index
    %c0_16 = arith.constant 0 : index
    %38 = vector.load %arg7[%c0_15, %c0_16] : memref<32x32xbf16, #tpu.memory_space<vmem>>, vector<32x32xbf16>
    %cst_17 = arith.constant dense<0.000000e+00> : vector<16x32xf32>
    %39 = tpu.matmul %30, %38, %cst_17 {dimension_numbers = #tpu.dot_dimension_numbers<[1], [0], [0], [1], [0, 0, 1, 1], [], []>} : vector<16x32xbf16>, vector<32x32xbf16>, vector<16x32xf32> -> vector<16x32xf32>
    %c0_18 = arith.constant 0 : index
    %c0_19 = arith.constant 0 : index
    %40 = vector.load %arg8[%c0_18, %c0_19] : memref<1x32xf32, #tpu.memory_space<vmem>>, vector<1x32xf32>
    %41 = vector.shape_cast %40 : vector<1x32xf32> to vector<32xf32>
    %42 = vector.shape_cast %41 : vector<32xf32> to vector<1x32xf32>
    %43 = vector.broadcast %42 : vector<1x32xf32> to vector<16x32xf32>
    %44 = arith.addf %39, %43 : vector<16x32xf32>
    %c0_20 = arith.constant 0 : index
    %c0_21 = arith.constant 0 : index
    %45 = vector.load %arg9[%c0_20, %c0_21] : memref<32x32xbf16, #tpu.memory_space<vmem>>, vector<32x32xbf16>
    %cst_22 = arith.constant dense<0.000000e+00> : vector<16x32xf32>
    %46 = tpu.matmul %30, %45, %cst_22 {dimension_numbers = #tpu.dot_dimension_numbers<[1], [0], [0], [1], [0, 0, 1, 1], [], []>} : vector<16x32xbf16>, vector<32x32xbf16>, vector<16x32xf32> -> vector<16x32xf32>
    %c0_23 = arith.constant 0 : index
    %c0_24 = arith.constant 0 : index
    %47 = vector.load %arg10[%c0_23, %c0_24] : memref<1x32xf32, #tpu.memory_space<vmem>>, vector<1x32xf32>
    %48 = vector.shape_cast %47 : vector<1x32xf32> to vector<32xf32>
    %49 = vector.shape_cast %48 : vector<32xf32> to vector<1x32xf32>
    %50 = vector.broadcast %49 : vector<1x32xf32> to vector<16x32xf32>
    %51 = arith.addf %46, %50 : vector<16x32xf32>
    %cst_25 = arith.constant 2.500000e-01 : f32
    %52 = vector.broadcast %cst_25 : f32 to vector<16x32xf32>
    %53 = arith.mulf %37, %52 : vector<16x32xf32>
    %54 = arith.truncf %53 : vector<16x32xf32> to vector<16x32xbf16>
    %c0_26 = arith.constant 0 : index
    %c0_27 = arith.constant 0 : index
    %c0_28 = arith.constant 0 : index
    %55 = vector.load %arg11[%c0_26, %c0_27, %c0_28] : memref<1x16x32xbf16, #tpu.memory_space<vmem>>, vector<1x16x32xbf16>
    %56 = vector.shape_cast %55 : vector<1x16x32xbf16> to vector<16x32xbf16>
    %57 = vector.shape_cast %54 : vector<16x32xbf16> to vector<1x16x32xbf16>
    tpu.vector_store %arg11[%c0_26, %c0_27, %c0_28], %57 {strides = array<i32>} : memref<1x16x32xbf16, #tpu.memory_space<vmem>>, vector<1x16x32xbf16>,
    %58 = arith.truncf %44 : vector<16x32xf32> to vector<16x32xbf16>
    %c0_29 = arith.constant 0 : index
    %c0_30 = arith.constant 0 : index
    %c0_31 = arith.constant 0 : index
    %59 = vector.load %arg12[%c0_29, %c0_30, %c0_31] : memref<1x16x32xbf16, #tpu.memory_space<vmem>>, vector<1x16x32xbf16>
    %60 = vector.shape_cast %59 : vector<1x16x32xbf16> to vector<16x32xbf16>
    %61 = vector.shape_cast %58 : vector<16x32xbf16> to vector<1x16x32xbf16>
    tpu.vector_store %arg12[%c0_29, %c0_30, %c0_31], %61 {strides = array<i32>} : memref<1x16x32xbf16, #tpu.memory_space<vmem>>, vector<1x16x32xbf16>,
    %62 = arith.truncf %51 : vector<16x32xf32> to vector<16x32xbf16>
    %c0_32 = arith.constant 0 : index
    %c0_33 = arith.constant 0 : index
    %c0_34 = arith.constant 0 : index
    %63 = vector.load %arg13[%c0_32, %c0_33, %c0_34] : memref<1x16x32xbf16, #tpu.memory_space<vmem>>, vector<1x16x32xbf16>
    %64 = vector.shape_cast %63 : vector<1x16x32xbf16> to vector<16x32xbf16>
    %65 = vector.shape_cast %62 : vector<16x32xbf16> to vector<1x16x32xbf16>
    tpu.vector_store %arg13[%c0_32, %c0_33, %c0_34], %65 {strides = array<i32>} : memref<1x16x32xbf16, #tpu.memory_space<vmem>>, vector<1x16x32xbf16>,
    return
  }
  func.func @transform_0(%arg0: i32, %arg1: i32) -> (i32, i32, i32) {
    %c0_i32 = arith.constant 0 : i32
    %c0_i32_0 = arith.constant 0 : i32
    return %arg0, %arg1, %c0_i32 : i32, i32, i32
  }
  func.func @transform_1(%arg0: i32, %arg1: i32) -> (i32, i32) {
    %c0_i32 = arith.constant 0 : i32
    %c0_i32_0 = arith.constant 0 : i32
    %c0_i32_1 = arith.constant 0 : i32
    return %c0_i32, %c0_i32_0 : i32, i32
  }
  func.func @transform_2(%arg0: i32, %arg1: i32) -> (i32, i32) {
    %c0_i32 = arith.constant 0 : i32
    %c0_i32_0 = arith.constant 0 : i32
    %c0_i32_1 = arith.constant 0 : i32
    return %c0_i32, %c0_i32_0 : i32, i32
  }
  func.func @transform_3(%arg0: i32, %arg1: i32) -> (i32, i32) {
    %c0_i32 = arith.constant 0 : i32
    %c0_i32_0 = arith.constant 0 : i32
    %c0_i32_1 = arith.constant 0 : i32
    return %c0_i32, %c0_i32_0 : i32, i32
  }
  func.func @transform_4(%arg0: i32, %arg1: i32) -> (i32, i32) {
    %c0_i32 = arith.constant 0 : i32
    %c0_i32_0 = arith.constant 0 : i32
    %c0_i32_1 = arith.constant 0 : i32
    return %c0_i32, %c0_i32_0 : i32, i32
  }
  func.func @transform_5(%arg0: i32, %arg1: i32) -> (i32, i32) {
    %c0_i32 = arith.constant 0 : i32
    %c0_i32_0 = arith.constant 0 : i32
    %c0_i32_1 = arith.constant 0 : i32
    return %c0_i32, %c0_i32_0 : i32, i32
  }
  func.func @transform_6(%arg0: i32, %arg1: i32) -> (i32, i32) {
    %c0_i32 = arith.constant 0 : i32
    %c0_i32_0 = arith.constant 0 : i32
    %c0_i32_1 = arith.constant 0 : i32
    return %c0_i32, %c0_i32_0 : i32, i32
  }
  func.func @transform_7(%arg0: i32, %arg1: i32) -> (i32, i32) {
    %c0_i32 = arith.constant 0 : i32
    %c0_i32_0 = arith.constant 0 : i32
    %c0_i32_1 = arith.constant 0 : i32
    return %c0_i32, %c0_i32_0 : i32, i32
  }
  func.func @transform_8(%arg0: i32, %arg1: i32) -> (i32, i32) {
    %c0_i32 = arith.constant 0 : i32
    %c0_i32_0 = arith.constant 0 : i32
    %c0_i32_1 = arith.constant 0 : i32
    return %c0_i32, %c0_i32_0 : i32, i32
  }
  func.func @transform_9(%arg0: i32, %arg1: i32) -> (i32, i32, i32) {
    %c0_i32 = arith.constant 0 : i32
    %c0_i32_0 = arith.constant 0 : i32
    return %arg0, %arg1, %c0_i32 : i32, i32, i32
  }
  func.func @transform_10(%arg0: i32, %arg1: i32) -> (i32, i32, i32) {
    %c0_i32 = arith.constant 0 : i32
    %c0_i32_0 = arith.constant 0 : i32
    return %arg0, %arg1, %c0_i32 : i32, i32, i32
  }
  func.func @transform_11(%arg0: i32, %arg1: i32) -> (i32, i32, i32) {
    %c0_i32 = arith.constant 0 : i32
    %c0_i32_0 = arith.constant 0 : i32
    return %arg0, %arg1, %c0_i32 : i32, i32, i32
  }
}

</mosaic_0001>

<llo_original>
// kernel: tpu_custom_call.1
$region0: #{tpu_custom_call.1}
  #allocation0 [shape = 'u32[]', space=smem, size = 0x4, offset = 0x4, fixed_abs, tag = 'smem constant byte address 0x4 - core index']
  #allocation1 [shape = 'u32[144,128]{1,0:T(1,128)}', space=vmem, size = 0x12000, scoped, tag = 'internal scratch']
  %s0 = inlined_call_operand.hbm [shape: f32[2,32,32], index: 0, kind: input, shape index: {}]
  %s1 = inlined_call_operand.vmem [shape: f32[1,32], index: 1, kind: input, shape index: {}]
  %s2 = inlined_call_operand.vmem [shape: f32[1,32], index: 2, kind: input, shape index: {}]
  %s3 = inlined_call_operand.hbm [shape: bf16[32,32], index: 3, kind: input, shape index: {}]
  %s4 = inlined_call_operand.vmem [shape: f32[1,32], index: 4, kind: input, shape index: {}]
  %s5 = inlined_call_operand.hbm [shape: bf16[32,32], index: 5, kind: input, shape index: {}]
  %s6 = inlined_call_operand.vmem [shape: f32[1,32], index: 6, kind: input, shape index: {}]
  %s7 = inlined_call_operand.hbm [shape: bf16[32,32], index: 7, kind: input, shape index: {}]
  %s8 = inlined_call_operand.vmem [shape: f32[1,32], index: 8, kind: input, shape index: {}]
  %s9 = inlined_call_operand.hbm [shape: bf16[2,32,32], index: 9, kind: output, shape index: {0}]
  %s10 = inlined_call_operand.hbm [shape: bf16[2,32,32], index: 10, kind: output, shape index: {1}]
  %s11 = inlined_call_operand.hbm [shape: bf16[2,32,32], index: 11, kind: output, shape index: {2}]
  %12 = xla_tuple %s9, %s10, %s11
  %s13 = sld [smem:[#allocation0]]
  $region101: #{tpu_custom_call.1} parent=0
    _
  %s15 = ssub.s32 1, %s13
  %s16 = scalar_select 0, %s15, %s13
  $region1: #{tpu_custom_call.1} parent=0
    #allocation2 [shape = 'u8[16384]{0}', space=vmem, size = 0x4000, scoped, tag = 'input window, operand 0']
    #allocation3 [shape = 's32[2]{0}', space=sflag, size = 0x8, scoped, tag = 'scoped memory for tpu_custom_call.1']
    #allocation4 [shape = 's32[2]{0}', space=sflag, size = 0x8, scoped, tag = 'scoped memory for tpu_custom_call.1']
    #allocation5 [shape = 'u8[8192]{0}', space=vmem, size = 0x2000, scoped, tag = 'input window, operand 3, single buffered']
    #allocation6 [shape = 's32[1]{0}', space=sflag, size = 0x4, scoped, tag = 'scoped memory for tpu_custom_call.1']
    #allocation7 [shape = 'u8[8192]{0}', space=vmem, size = 0x2000, scoped, tag = 'input window, operand 5, single buffered']
    #allocation8 [shape = 'u8[8192]{0}', space=vmem, size = 0x2000, scoped, tag = 'input window, operand 7, single buffered']
    #allocation9 [shape = 's32[1]{0}', space=sflag, size = 0x4, scoped, tag = 'scoped memory for tpu_custom_call.1']
    #allocation10 [shape = 'u8[8192]{0}', space=vmem, size = 0x2000, scoped, tag = 'output window, operand 0']
    #allocation11 [shape = 'u8[8192]{0}', space=vmem, size = 0x2000, scoped, tag = 'output window, operand 1']
    #allocation12 [shape = 's32[2]{0}', space=sflag, size = 0x8, scoped, tag = 'scoped memory for tpu_custom_call.1']
    #allocation13 [shape = 'u8[8192]{0}', space=vmem, size = 0x2000, scoped, tag = 'output window, operand 2']
    %17 = vsyncpa [#allocation3], 0
    %s18 = scalar_lea.sflag [#allocation3], 1
    %19 = vsyncpa %s18, 0
    %20 = vsyncpa [#allocation6], 0
    %21 = vsyncpa [#allocation9], 0
    %22 = vsyncpa [#allocation4], 0
    %s23 = scalar_lea.sflag [#allocation4], 1
    %24 = vsyncpa %s23, 0
    %25 = vsyncpa [#allocation12], 0
    %s26 = scalar_lea.sflag [#allocation12], 1
    %27 = vsyncpa %s26, 0
    loop: start=0, step=1, limit=6
    $region2: #{tpu_custom_call.1} parent=1 // loop_pre_header
      _
    $region3: #{tpu_custom_call.1} parent=1 // loop_header
      %s29 = sphi 0, %s33
      %p30 = scmp.ge.s32.totalorder %s29, 6
      %s36 = sphi 0, %s48
      %s37 = sphi 0, %s44
      %s38 = sphi 0, %s36
      %s39 = sphi 0, %s37
      %s40 = sphi 0, %s38
      %s41 = sphi 0, %s39
      %s53 = sphi 0, %s55
      %s56 = sphi 0, %s53
      %s57 = sphi 0, %s56
      %s73 = sphi 0, %s57
      %s77 = sphi 0, %s77
      %s79 = sphi 0, %s77
      %s80 = sphi 0, %s79
      %s94 = sphi 0, %s80
      %s98 = sphi 0, %s98
      %s100 = sphi 0, %s98
      %s101 = sphi 0, %s100
      %s115 = sphi 0, %s101
      %s119 = sphi 0, %s119
      %s121 = sphi 0, %s119
      %s122 = sphi 0, %s121
      %s136 = sphi 0, %s122
      %s140 = sphi 0, %s140
      %s142 = sphi 0, %s140
      %s143 = sphi 0, %s142
      %s157 = sphi 0, %s143
      %s161 = sphi 0, %s161
      %s163 = sphi 0, %s161
      %s164 = sphi 0, %s163
      %s178 = sphi 0, %s164
      %s182 = sphi 0, %s182
      %s184 = sphi 0, %s182
      %s185 = sphi 0, %s184
      %s199 = sphi 0, %s185
      %s203 = sphi 0, %s203
      %s205 = sphi 0, %s203
      %s206 = sphi 0, %s205
      %s220 = sphi 0, %s206
      %s224 = sphi 0, %s224
      %s226 = sphi 0, %s224
      %s227 = sphi 0, %s226
      %s241 = sphi 0, %s227
      %s249 = sphi 0, %s251
      %s252 = sphi 0, %s249
      %s253 = sphi 0, %s252
      %s269 = sphi 0, %s253
      %s277 = sphi 0, %s279
      %s280 = sphi 0, %s277
      %s281 = sphi 0, %s280
      %s297 = sphi 0, %s281
      %s305 = sphi 0, %s307
      %s308 = sphi 0, %s305
      %s309 = sphi 0, %s308
      %s325 = sphi 0, %s309
    $region4: #{tpu_custom_call.1} parent=1 // loop_header_branch
      %32 = sbr.rel (%p30) target = $region8
    $region5: #{tpu_custom_call.1} parent=1 // loop_body
      %s34 = ssub.s32 %s29, 1
      %s35 = ssub.s32 %s29, 2
      %s42 = sadd.s32 1, %s37
      %p43 = scmp.ge.s32.totalorder %s42, 2
      %s44 = scalar_select %p43, 0, %s42
      %s45 = sadd.s32 1, %s36
      %s46 = scalar_select %p43, %s45, %s36
      %p47 = scmp.ge.s32.totalorder %s46, 2
      %s48 = scalar_select %p47, 0, %s46
      %s49 = ssub.s32 %s36, %s48
      %s50 = ssub.s32 %s37, %s44
      %s51 = sor.u32 %s49, %s50
      %p52 = scmp.eq.s32.totalorder %s51, 0
      %s54 = sadd.s32 %s53, 1
      %s55 = scalar_select %p52, %s53, %s54
      %p58 = pneg %p52
      %p59 = scmp.eq.s32.totalorder %s29, 3
      %p60 = por %p58, %p59
      %p61 = scmp.ne.s32.totalorder %s53, %s56
      %p62 = scmp.eq.s32.totalorder %s29, 0
      %p63 = por %p61, %p62
      %p64 = scmp.ne.s32.totalorder %s53, %s56
      %p65 = scmp.eq.s32.totalorder %s34, 3
      %p66 = por %p64, %p65
      %p67 = scmp.ne.s32.totalorder %s56, %s57
      %p68 = scmp.eq.s32.totalorder %s34, 0
      %p69 = por %p67, %p68
      %p70 = scmp.ne.s32.totalorder %s56, %s57
      %p71 = scmp.eq.s32.totalorder %s35, 3
      %p72 = por %p70, %p71
      %p74 = scmp.ne.s32.totalorder %s57, %s73
      %p75 = scmp.eq.s32.totalorder %s35, 0
      %p76 = por %p74, %p75
      %s78 = sadd.s32 %s77, 1
      %p81 = scmp.eq.s32.totalorder %s29, 3
      %p82 = scmp.ne.s32.totalorder %s77, %s79
      %p83 = scmp.eq.s32.totalorder %s29, 0
      %p84 = por %p82, %p83
      %p85 = scmp.ne.s32.totalorder %s77, %s79
      %p86 = scmp.eq.s32.totalorder %s34, 3
      %p87 = por %p85, %p86
      %p88 = scmp.ne.s32.totalorder %s79, %s80
      %p89 = scmp.eq.s32.totalorder %s34, 0
      %p90 = por %p88, %p89
      %p91 = scmp.ne.s32.totalorder %s79, %s80
      %p92 = scmp.eq.s32.totalorder %s35, 3
      %p93 = por %p91, %p92
      %p95 = scmp.ne.s32.totalorder %s80, %s94
      %p96 = scmp.eq.s32.totalorder %s35, 0
      %p97 = por %p95, %p96
      %s99 = sadd.s32 %s98, 1
      %p102 = scmp.eq.s32.totalorder %s29, 3
      %p103 = scmp.ne.s32.totalorder %s98, %s100
      %p104 = scmp.eq.s32.totalorder %s29, 0
      %p105 = por %p103, %p104
      %p106 = scmp.ne.s32.totalorder %s98, %s100
      %p107 = scmp.eq.s32.totalorder %s34, 3
      %p108 = por %p106, %p107
      %p109 = scmp.ne.s32.totalorder %s100, %s101
      %p110 = scmp.eq.s32.totalorder %s34, 0
      %p111 = por %p109, %p110
      %p112 = scmp.ne.s32.totalorder %s100, %s101
      %p113 = scmp.eq.s32.totalorder %s35, 3
      %p114 = por %p112, %p113
      %p116 = scmp.ne.s32.totalorder %s101, %s115
      %p117 = scmp.eq.s32.totalorder %s35, 0
      %p118 = por %p116, %p117
      %s120 = sadd.s32 %s119, 1
      %p123 = scmp.eq.s32.totalorder %s29, 3
      %p124 = scmp.ne.s32.totalorder %s119, %s121
      %p125 = scmp.eq.s32.totalorder %s29, 0
      %p126 = por %p124, %p125
      %p127 = scmp.ne.s32.totalorder %s119, %s121
      %p128 = scmp.eq.s32.totalorder %s34, 3
      %p129 = por %p127, %p128
      %p130 = scmp.ne.s32.totalorder %s121, %s122
      %p131 = scmp.eq.s32.totalorder %s34, 0
      %p132 = por %p130, %p131
      %p133 = scmp.ne.s32.totalorder %s121, %s122
      %p134 = scmp.eq.s32.totalorder %s35, 3
      %p135 = por %p133, %p134
      %p137 = scmp.ne.s32.totalorder %s122, %s136
      %p138 = scmp.eq.s32.totalorder %s35, 0
      %p139 = por %p137, %p138
      %s141 = sadd.s32 %s140, 1
      %p144 = scmp.eq.s32.totalorder %s29, 3
      %p145 = scmp.ne.s32.totalorder %s140, %s142
      %p146 = scmp.eq.s32.totalorder %s29, 0
      %p147 = por %p145, %p146
      %p148 = scmp.ne.s32.totalorder %s140, %s142
      %p149 = scmp.eq.s32.totalorder %s34, 3
      %p150 = por %p148, %p149
      %p151 = scmp.ne.s32.totalorder %s142, %s143
      %p152 = scmp.eq.s32.totalorder %s34, 0
      %p153 = por %p151, %p152
      %p154 = scmp.ne.s32.totalorder %s142, %s143
      %p155 = scmp.eq.s32.totalorder %s35, 3
      %p156 = por %p154, %p155
      %p158 = scmp.ne.s32.totalorder %s143, %s157
      %p159 = scmp.eq.s32.totalorder %s35, 0
      %p160 = por %p158, %p159
      %s162 = sadd.s32 %s161, 1
      %p165 = scmp.eq.s32.totalorder %s29, 3
      %p166 = scmp.ne.s32.totalorder %s161, %s163
      %p167 = scmp.eq.s32.totalorder %s29, 0
      %p168 = por %p166, %p167
      %p169 = scmp.ne.s32.totalorder %s161, %s163
      %p170 = scmp.eq.s32.totalorder %s34, 3
      %p171 = por %p169, %p170
      %p172 = scmp.ne.s32.totalorder %s163, %s164
      %p173 = scmp.eq.s32.totalorder %s34, 0
      %p174 = por %p172, %p173
      %p175 = scmp.ne.s32.totalorder %s163, %s164
      %p176 = scmp.eq.s32.totalorder %s35, 3
      %p177 = por %p175, %p176
      %p179 = scmp.ne.s32.totalorder %s164, %s178
      %p180 = scmp.eq.s32.totalorder %s35, 0
      %p181 = por %p179, %p180
      %s183 = sadd.s32 %s182, 1
      %p186 = scmp.eq.s32.totalorder %s29, 3
      %p187 = scmp.ne.s32.totalorder %s182, %s184
      %p188 = scmp.eq.s32.totalorder %s29, 0
      %p189 = por %p187, %p188
      %p190 = scmp.ne.s32.totalorder %s182, %s184
      %p191 = scmp.eq.s32.totalorder %s34, 3
      %p192 = por %p190, %p191
      %p193 = scmp.ne.s32.totalorder %s184, %s185
      %p194 = scmp.eq.s32.totalorder %s34, 0
      %p195 = por %p193, %p194
      %p196 = scmp.ne.s32.totalorder %s184, %s185
      %p197 = scmp.eq.s32.totalorder %s35, 3
      %p198 = por %p196, %p197
      %p200 = scmp.ne.s32.totalorder %s185, %s199
      %p201 = scmp.eq.s32.totalorder %s35, 0
      %p202 = por %p200, %p201
      %s204 = sadd.s32 %s203, 1
      %p207 = scmp.eq.s32.totalorder %s29, 3
      %p208 = scmp.ne.s32.totalorder %s203, %s205
      %p209 = scmp.eq.s32.totalorder %s29, 0
      %p210 = por %p208, %p209
      %p211 = scmp.ne.s32.totalorder %s203, %s205
      %p212 = scmp.eq.s32.totalorder %s34, 3
      %p213 = por %p211, %p212
      %p214 = scmp.ne.s32.totalorder %s205, %s206
      %p215 = scmp.eq.s32.totalorder %s34, 0
      %p216 = por %p214, %p215
      %p217 = scmp.ne.s32.totalorder %s205, %s206
      %p218 = scmp.eq.s32.totalorder %s35, 3
      %p219 = por %p217, %p218
      %p221 = scmp.ne.s32.totalorder %s206, %s220
      %p222 = scmp.eq.s32.totalorder %s35, 0
      %p223 = por %p221, %p222
      %s225 = sadd.s32 %s224, 1
      %p228 = scmp.eq.s32.totalorder %s29, 3
      %p229 = scmp.ne.s32.totalorder %s224, %s226
      %p230 = scmp.eq.s32.totalorder %s29, 0
      %p231 = por %p229, %p230
      %p232 = scmp.ne.s32.totalorder %s224, %s226
      %p233 = scmp.eq.s32.totalorder %s34, 3
      %p234 = por %p232, %p233
      %p235 = scmp.ne.s32.totalorder %s226, %s227
      %p236 = scmp.eq.s32.totalorder %s34, 0
      %p237 = por %p235, %p236
      %p238 = scmp.ne.s32.totalorder %s226, %s227
      %p239 = scmp.eq.s32.totalorder %s35, 3
      %p240 = por %p238, %p239
      %p242 = scmp.ne.s32.totalorder %s227, %s241
      %p243 = scmp.eq.s32.totalorder %s35, 0
      %p244 = por %p242, %p243
      %s245 = ssub.s32 %s36, %s48
      %s246 = ssub.s32 %s37, %s44
      %s247 = sor.u32 %s245, %s246
      %p248 = scmp.eq.s32.totalorder %s247, 0
      %s250 = sadd.s32 %s249, 1
      %s251 = scalar_select %p248, %s249, %s250
      %p254 = pneg %p248
      %p255 = scmp.eq.s32.totalorder %s29, 3
      %p256 = por %p254, %p255
      %p257 = scmp.ne.s32.totalorder %s249, %s252
      %p258 = scmp.eq.s32.totalorder %s29, 0
      %p259 = por %p257, %p258
      %p260 = scmp.ne.s32.totalorder %s249, %s252
      %p261 = scmp.eq.s32.totalorder %s34, 3
      %p262 = por %p260, %p261
      %p263 = scmp.ne.s32.totalorder %s252, %s253
      %p264 = scmp.eq.s32.totalorder %s34, 0
      %p265 = por %p263, %p264
      %p266 = scmp.ne.s32.totalorder %s252, %s253
      %p267 = scmp.eq.s32.totalorder %s35, 3
      %p268 = por %p266, %p267
      %p270 = scmp.ne.s32.totalorder %s253, %s269
      %p271 = scmp.eq.s32.totalorder %s35, 0
      %p272 = por %p270, %p271
      %s273 = ssub.s32 %s36, %s48
      %s274 = ssub.s32 %s37, %s44
      %s275 = sor.u32 %s273, %s274
      %p276 = scmp.eq.s32.totalorder %s275, 0
      %s278 = sadd.s32 %s277, 1
      %s279 = scalar_select %p276, %s277, %s278
      %p282 = pneg %p276
      %p283 = scmp.eq.s32.totalorder %s29, 3
      %p284 = por %p282, %p283
      %p285 = scmp.ne.s32.totalorder %s277, %s280
      %p286 = scmp.eq.s32.totalorder %s29, 0
      %p287 = por %p285, %p286
      %p288 = scmp.ne.s32.totalorder %s277, %s280
      %p289 = scmp.eq.s32.totalorder %s34, 3
      %p290 = por %p288, %p289
      %p291 = scmp.ne.s32.totalorder %s280, %s281
      %p292 = scmp.eq.s32.totalorder %s34, 0
      %p293 = por %p291, %p292
      %p294 = scmp.ne.s32.totalorder %s280, %s281
      %p295 = scmp.eq.s32.totalorder %s35, 3
      %p296 = por %p294, %p295
      %p298 = scmp.ne.s32.totalorder %s281, %s297
      %p299 = scmp.eq.s32.totalorder %s35, 0
      %p300 = por %p298, %p299
      %s301 = ssub.s32 %s36, %s48
      %s302 = ssub.s32 %s37, %s44
      %s303 = sor.u32 %s301, %s302
      %p304 = scmp.eq.s32.totalorder %s303, 0
      %s306 = sadd.s32 %s305, 1
      %s307 = scalar_select %p304, %s305, %s306
      %p310 = pneg %p304
      %p311 = scmp.eq.s32.totalorder %s29, 3
      %p312 = por %p310, %p311
      %p313 = scmp.ne.s32.totalorder %s305, %s308
      %p314 = scmp.eq.s32.totalorder %s29, 0
      %p315 = por %p313, %p314
      %p316 = scmp.ne.s32.totalorder %s305, %s308
      %p317 = scmp.eq.s32.totalorder %s34, 3
      %p318 = por %p316, %p317
      %p319 = scmp.ne.s32.totalorder %s308, %s309
      %p320 = scmp.eq.s32.totalorder %s34, 0
      %p321 = por %p319, %p320
      %p322 = scmp.ne.s32.totalorder %s308, %s309
      %p323 = scmp.eq.s32.totalorder %s35, 3
      %p324 = por %p322, %p323
      %p326 = scmp.ne.s32.totalorder %s309, %s325
      %p327 = scmp.eq.s32.totalorder %s35, 0
      %p328 = por %p326, %p327
      %p329 = scmp.le.s32.totalorder 1, %s29
      %p330 = scmp.lt.s32.totalorder %s29, 5
      %p331 = pnand %p329, %p330
      %p332 = pneg %p331
      // Predicated region
      $region9: #{tpu_custom_call.1} parent=5 // pred_check
        _
      $region10: #{tpu_custom_call.1} parent=5 // pred_check_branch
        %334 = sbr.rel (%p331) target = $region12
      $region11: #{tpu_custom_call.1} parent=5 // pred_region
        %s335 = ssub.s32 %s29, 1
        // Predicated region
        $region13: #{tpu_custom_call.1} parent=11 // pred_check
          %p336 = pneg %p90
        $region14: #{tpu_custom_call.1} parent=11 // pred_check_branch
          %338 = sbr.rel (%p336) target = $region16
        $region15: #{tpu_custom_call.1} parent=11 // pred_region
          _
        $region16: #{tpu_custom_call.1} parent=11 // pred_fallthru
          _
        // Predicated region
        $region17: #{tpu_custom_call.1} parent=11 // pred_check
          %p339 = pneg %p111
        $region18: #{tpu_custom_call.1} parent=11 // pred_check_branch
          %341 = sbr.rel (%p339) target = $region20
        $region19: #{tpu_custom_call.1} parent=11 // pred_region
          _
        $region20: #{tpu_custom_call.1} parent=11 // pred_fallthru
          _
        // Predicated region
        $region21: #{tpu_custom_call.1} parent=11 // pred_check
          %p342 = pneg %p132
        $region22: #{tpu_custom_call.1} parent=11 // pred_check_branch
          %344 = sbr.rel (%p342) target = $region24
        $region23: #{tpu_custom_call.1} parent=11 // pred_region
          %s346 = ssub.s32 256, 256
          %347 = vsyncadd [#allocation6], %s346
          %s348 = sshll.u32 [#allocation5], 4
          %s349 = int_to_ptr.vmem [resolvable:$true] %s348
          %354 = dma.hbm_to_vmem [thread:$0]  %s3, 256, %s349, [#allocation6], 64, 64, 4
        $region24: #{tpu_custom_call.1} parent=11 // pred_fallthru
          _
        // Predicated region
        $region25: #{tpu_custom_call.1} parent=11 // pred_check
          %p355 = pneg %p153
        $region26: #{tpu_custom_call.1} parent=11 // pred_check_branch
          %357 = sbr.rel (%p355) target = $region28
        $region27: #{tpu_custom_call.1} parent=11 // pred_region
          _
        $region28: #{tpu_custom_call.1} parent=11 // pred_fallthru
          _
        // Predicated region
        $region29: #{tpu_custom_call.1} parent=11 // pred_check
          %p358 = pneg %p174
        $region30: #{tpu_custom_call.1} parent=11 // pred_check_branch
          %360 = sbr.rel (%p358) target = $region32
        $region31: #{tpu_custom_call.1} parent=11 // pred_region
          %s362 = ssub.s32 256, 256
          %363 = vsyncadd [#allocation6], %s362
          %s364 = sshll.u32 [#allocation7], 4
          %s365 = int_to_ptr.vmem [resolvable:$true] %s364
          %370 = dma.hbm_to_vmem [thread:$0]  %s5, 256, %s365, [#allocation6], 64, 64, 4
        $region32: #{tpu_custom_call.1} parent=11 // pred_fallthru
          _
        // Predicated region
        $region33: #{tpu_custom_call.1} parent=11 // pred_check
          %p371 = pneg %p195
        $region34: #{tpu_custom_call.1} parent=11 // pred_check_branch
          %373 = sbr.rel (%p371) target = $region36
        $region35: #{tpu_custom_call.1} parent=11 // pred_region
          _
        $region36: #{tpu_custom_call.1} parent=11 // pred_fallthru
          _
        // Predicated region
        $region37: #{tpu_custom_call.1} parent=11 // pred_check
          %p374 = pneg %p216
        $region38: #{tpu_custom_call.1} parent=11 // pred_check_branch
          %376 = sbr.rel (%p374) target = $region40
        $region39: #{tpu_custom_call.1} parent=11 // pred_region
          %s378 = ssub.s32 256, 256
          %379 = vsyncadd [#allocation9], %s378
          %s380 = sshll.u32 [#allocation8], 4
          %s381 = int_to_ptr.vmem [resolvable:$true] %s380
          %386 = dma.hbm_to_vmem [thread:$0]  %s7, 256, %s381, [#allocation9], 64, 64, 4
        $region40: #{tpu_custom_call.1} parent=11 // pred_fallthru
          _
        // Predicated region
        $region41: #{tpu_custom_call.1} parent=11 // pred_check
          %p387 = pneg %p237
        $region42: #{tpu_custom_call.1} parent=11 // pred_check_branch
          %389 = sbr.rel (%p387) target = $region44
        $region43: #{tpu_custom_call.1} parent=11 // pred_region
          _
        $region44: #{tpu_custom_call.1} parent=11 // pred_fallthru
          _
      $region12: #{tpu_custom_call.1} parent=5 // pred_fallthru
        _
      %p390 = scmp.lt.s32.totalorder %s29, 4
      // Predicated region
      $region45: #{tpu_custom_call.1} parent=5 // pred_check
        %p391 = pneg %p390
      $region46: #{tpu_custom_call.1} parent=5 // pred_check_branch
        %393 = sbr.rel (%p391) target = $region48
      $region47: #{tpu_custom_call.1} parent=5 // pred_region
        // Predicated region
        $region49: #{tpu_custom_call.1} parent=47 // pred_check
          %p394 = pneg %p63
        $region50: #{tpu_custom_call.1} parent=47 // pred_check_branch
          %396 = sbr.rel (%p394) target = $region52
        $region51: #{tpu_custom_call.1} parent=47 // pred_region
          %s397 = sand.u32 %s53, 1
          %s398 = scalar_lea.sflag [#allocation3], %s397
          %s399 = sand.u32 %s53, 1
          %s400 = smul.addr %s399, 16
          %s401 = scalar_lea.vmem [#allocation2], %s400
          %s402 = smul.u32 2, %s37
          %s404 = ssub.s32 256, 256
          %405 = vsyncadd %s398, %s404
          %s406 = smul.addr %s36, 4
          %s407 = sadd.s32 %s402, %s406
          %s408 = smul.addr %s407, 128
          %s409 = scalar_lea.hbm %s0, %s408
          %s410 = sshll.u32 %s401, 4
          %s411 = int_to_ptr.vmem [resolvable:$true] %s410
          %416 = dma.hbm_to_vmem [thread:$0]  %s409, 256, %s411, %s398, 128, 128, 8
        $region52: #{tpu_custom_call.1} parent=47 // pred_fallthru
          _
      $region48: #{tpu_custom_call.1} parent=5 // pred_fallthru
        _
      %p417 = scmp.le.s32.totalorder 1, %s29
      %p418 = scmp.lt.s32.totalorder %s29, 5
      %p419 = pnand %p417, %p418
      %p420 = pneg %p419
      // Predicated region
      $region53: #{tpu_custom_call.1} parent=5 // pred_check
        _
      $region54: #{tpu_custom_call.1} parent=5 // pred_check_branch
        %422 = sbr.rel (%p419) target = $region56
      $region55: #{tpu_custom_call.1} parent=5 // pred_region
        %s423 = ssub.s32 %s29, 1
        %s424 = sand.u32 %s56, 1
        %s425 = scalar_lea.sflag [#allocation3], %s424
        %s426 = sand.u32 %s56, 1
        %s427 = smul.addr %s426, 16
        %s428 = scalar_lea.vmem [#allocation2], %s427
        // Predicated region
        $region57: #{tpu_custom_call.1} parent=55 // pred_check
          %p429 = pneg %p69
        $region58: #{tpu_custom_call.1} parent=55 // pred_check_branch
          %431 = sbr.rel (%p429) target = $region60
        $region59: #{tpu_custom_call.1} parent=55 // pred_region
          %432 = dma.done %s425, 256
        $region60: #{tpu_custom_call.1} parent=55 // pred_fallthru
          _
        // Predicated region
        $region61: #{tpu_custom_call.1} parent=55 // pred_check
          %p433 = pneg %p132
        $region62: #{tpu_custom_call.1} parent=55 // pred_check_branch
          %435 = sbr.rel (%p433) target = $region64
        $region63: #{tpu_custom_call.1} parent=55 // pred_region
          %436 = dma.done [#allocation6], 256
        $region64: #{tpu_custom_call.1} parent=55 // pred_fallthru
          _
        // Predicated region
        $region65: #{tpu_custom_call.1} parent=55 // pred_check
          %p437 = pneg %p174
        $region66: #{tpu_custom_call.1} parent=55 // pred_check_branch
          %439 = sbr.rel (%p437) target = $region68
        $region67: #{tpu_custom_call.1} parent=55 // pred_region
          %440 = dma.done [#allocation6], 256
        $region68: #{tpu_custom_call.1} parent=55 // pred_fallthru
          _
        // Predicated region
        $region69: #{tpu_custom_call.1} parent=55 // pred_check
          %p441 = pneg %p216
        $region70: #{tpu_custom_call.1} parent=55 // pred_check_branch
          %443 = sbr.rel (%p441) target = $region72
        $region71: #{tpu_custom_call.1} parent=55 // pred_region
          %444 = dma.done [#allocation9], 256
        $region72: #{tpu_custom_call.1} parent=55 // pred_fallthru
          _
        %s445 = sand.u32 %s56, 1
        %s446 = scalar_lea.sflag [#allocation3], %s445
        %s447 = sand.u32 %s56, 1
        %s448 = smul.addr %s447, 16
        %s449 = scalar_lea.vmem [#allocation2], %s448
        %p450 = pneg %p69
        %p451 = pneg %p66
        %p452 = pneg %p90
        %p453 = pneg %p87
        %p454 = pneg %p111
        %p455 = pneg %p108
        %p456 = pneg %p132
        %p457 = pneg %p129
        %p458 = pneg %p153
        %p459 = pneg %p150
        %p460 = pneg %p174
        %p461 = pneg %p171
        %p462 = pneg %p195
        %p463 = pneg %p192
        %p464 = pneg %p216
        %p465 = pneg %p213
        %p466 = pneg %p237
        %p467 = pneg %p234
        %p468 = pneg %p265
        %p469 = pneg %p262
        %s470 = sand.u32 %s252, 1
        %s471 = scalar_lea.sflag [#allocation4], %s470
        %s472 = sand.u32 %s252, 1
        %s473 = smul.addr %s472, 8
        %s474 = scalar_lea.vmem [#allocation10], %s473
        %p475 = pneg %p293
        %p476 = pneg %p290
        %s477 = sand.u32 %s34, 1
        %s478 = scalar_lea.sflag [#allocation12], %s477
        %s479 = sand.u32 %s280, 1
        %s480 = smul.addr %s479, 8
        %s481 = scalar_lea.vmem [#allocation11], %s480
        %p482 = pneg %p321
        %p483 = pneg %p318
        %s484 = sand.u32 %s34, 1
        %s485 = scalar_lea.sflag [#allocation12], %s484
        %s486 = sand.u32 %s308, 1
        %s487 = smul.addr %s486, 8
        %s488 = scalar_lea.vmem [#allocation13], %s487
        %s489 = smul.u32 2, %s39
        %s490 = smul.u32 2, %s39
        %s491 = smul.u32 2, %s39
        %s492 = smul.u32 2, %s39
        %v494 = vld [vmem:[%s428] sm:$0xff]
        %v495 = vld [vmem:[%s428 + $0x8] sm:$0xff]
        %v496 = vld [vmem:[%s1] sm:$0x1]
        %v497 = vld [vmem:[%s2] sm:$0x1]
        %vm498 = vcmask 261120
        %v499 = vsel %vm498, %v494, 0.0
        %500 = vadd.xlane.f32.xlu0 %v499
        %v501 = vpop.xlane.xlu0 %500
        %v502 = vsel %vm498, %v495, 0.0
        %503 = vadd.xlane.f32.xlu0 %v502
        %v504 = vpop.xlane.xlu0 %503
        %v505 = vrcp.pop 32.0
        %v506 = vmul.f32 %v501, %v505
        %v507 = vmul.f32 %v504, %v505
        %v508 = vsub.f32 %v494, %v506
        %v509 = vsub.f32 %v495, %v507
        %v510 = vmul.f32 %v508, %v508
        %v511 = vmul.f32 %v509, %v509
        %v512 = vsel %vm498, %v510, 0.0
        %513 = vadd.xlane.f32.xlu0 %v512
        %v514 = vpop.xlane.xlu0 %513
        %v515 = vsel %vm498, %v511, 0.0
        %516 = vadd.xlane.f32.xlu0 %v515
        %v517 = vpop.xlane.xlu0 %516
        %v518 = vmul.f32 %v514, %v505
        %v519 = vmul.f32 %v517, %v505
        %v520 = vadd.f32 %v518, 1e-06
        %v521 = vadd.f32 %v519, 1e-06
        %v522 = vrsqrt.pop %v520
        %v523 = vrsqrt.pop %v521
        %v524 = vmul.f32 %v508, %v522
        %v525 = vmul.f32 %v509, %v523
        %v527 = vlaneseq
        %v528 = vshrl.u32 %v527, 7
        %v529 = vsub.s32 0, %v528
        %v530 = vrot.slane %v496, %v529
        %v532 = vmul.f32 %v524, %v530
        %v533 = vmul.f32 %v525, %v530
        %v535 = vlaneseq
        %v536 = vshrl.u32 %v535, 7
        %v537 = vsub.s32 0, %v536
        %v538 = vrot.slane %v497, %v537
        %v540 = vadd.f32 %v532, %v538
        %v541 = vadd.f32 %v533, %v538
        %v542 = vpack.c.bf16 %v541, %v540
        %v543 = vld [vmem:[#allocation5] sm:$0xf]
        %v544 = vld [vmem:[#allocation5 + $0x4] sm:$0xf]
        %v545 = vld [vmem:[#allocation5 + $0x8] sm:$0xf]
        %v546 = vld [vmem:[#allocation5 + $0xc] sm:$0xf]
        %v547 = vld [vmem:[%s4] sm:$0x1]
        %v549 = vlaneseq
        %v550 = vshrl.u32 %v549, 7
        %v551 = vsub.s32 0, %v550
        %v552 = vrot.slane %v547, %v551
        %v558 = vunpack.c.l.b16 %v543
        %v559 = vunpack.c.l.b16 %v544
        %v560 = vunpack.c.l.b16 %v545
        %v561 = vunpack.c.l.b16 %v546
        %v562 = vpack.c.b16 %v559, %v558
        %v563 = vpack.c.b16 %v561, %v560
        %v567 = vsel %vm498, %v542, 0
        %569 = vmatprep.subr.bf16.mxu0 0
        %570 = vmatpush1.bf16.msra.mxu0 0
        %571 = vmatprep.subr.bf16.mxu0 0
        %572 = vmatpush1.bf16.msra.mxu0 0
        %573 = vmatprep.subr.bf16.mxu0 0
        %574 = vmatpush1.bf16.msra.mxu0 0
        %575 = vmatprep.subr.bf16.mxu0 0
        %576 = vmatpush1.bf16.msra.mxu0 0
        %577 = vmatprep.subr.bf16.mxu0 0
        %578 = vmatpush1.bf16.msra.mxu0 0
        %579 = vmatprep.subr.bf16.mxu0 0
        %580 = vmatpush1.bf16.msra.mxu0 0
        %581 = vmatprep.subr.bf16.mxu0 0
        %582 = vmatpush1.bf16.msra.mxu0 %v563
        %583 = vmatprep.subr.bf16.mxu0 0
        %584 = vmatpush1.bf16.msra.mxu0 %v562
        %585 = vmatprep.subr.bf16.mxu0 0
        %586 = vmatpush2.bf16.msra.mxu0 0
        %587 = vmatprep.subr.bf16.mxu0 0
        %588 = vmatpush2.bf16.msra.mxu0 0
        %589 = vmatprep.subr.bf16.mxu0 0
        %590 = vmatpush2.bf16.msra.mxu0 0
        %591 = vmatprep.subr.bf16.mxu0 0
        %592 = vmatpush2.bf16.msra.mxu0 0
        %593 = vmatprep.subr.bf16.mxu0 0
        %594 = vmatpush2.bf16.msra.mxu0 0
        %595 = vmatprep.subr.bf16.mxu0 0
        %596 = vmatpush2.bf16.msra.mxu0 0
        %597 = vmatprep.subr.bf16.mxu0 0
        %598 = vmatpush2.bf16.msra.mxu0 0
        %599 = vmatprep.subr.bf16.mxu0 0
        %600 = vmatpush2.bf16.msra.mxu0 0
        %601 = vmatprep.mubr.bf16.mxu0 0
        %602 = vmatmul.mubr.bf16.gmra.mxu0 %v567
        %v603 = vpop.f32.mrf.mxu0
        %v604 = vadd.f32 %v552, %v603
        %v605 = vpop.f32.mrf.mxu0
        %v606 = vpop.f32.mrf.mxu0
        %v607 = vadd.f32 %v552, %v606
        %v608 = vpop.f32.mrf.mxu0
        %609 = vdwg.mxu0
        %v610 = vld [vmem:[#allocation7] sm:$0xf]
        %v611 = vld [vmem:[#allocation7 + $0x4] sm:$0xf]
        %v612 = vld [vmem:[#allocation7 + $0x8] sm:$0xf]
        %v613 = vld [vmem:[#allocation7 + $0xc] sm:$0xf]
        %v614 = vld [vmem:[%s6] sm:$0x1]
        %v616 = vlaneseq
        %v617 = vshrl.u32 %v616, 7
        %v618 = vsub.s32 0, %v617
        %v619 = vrot.slane %v614, %v618
        %v625 = vunpack.c.l.b16 %v610
        %v626 = vunpack.c.l.b16 %v611
        %v627 = vunpack.c.l.b16 %v612
        %v628 = vunpack.c.l.b16 %v613
        %v629 = vpack.c.b16 %v626, %v625
        %v630 = vpack.c.b16 %v628, %v627
        %633 = vmatprep.subr.bf16.mxu0 0
        %634 = vmatpush1.bf16.msra.mxu0 0
        %635 = vmatprep.subr.bf16.mxu0 0
        %636 = vmatpush1.bf16.msra.mxu0 0
        %637 = vmatprep.subr.bf16.mxu0 0
        %638 = vmatpush1.bf16.msra.mxu0 0
        %639 = vmatprep.subr.bf16.mxu0 0
        %640 = vmatpush1.bf16.msra.mxu0 0
        %641 = vmatprep.subr.bf16.mxu0 0
        %642 = vmatpush1.bf16.msra.mxu0 0
        %643 = vmatprep.subr.bf16.mxu0 0
        %644 = vmatpush1.bf16.msra.mxu0 0
        %645 = vmatprep.subr.bf16.mxu0 0
        %646 = vmatpush1.bf16.msra.mxu0 %v630
        %647 = vmatprep.subr.bf16.mxu0 0
        %648 = vmatpush1.bf16.msra.mxu0 %v629
        %649 = vmatprep.subr.bf16.mxu0 0
        %650 = vmatpush2.bf16.msra.mxu0 0
        %651 = vmatprep.subr.bf16.mxu0 0
        %652 = vmatpush2.bf16.msra.mxu0 0
        %653 = vmatprep.subr.bf16.mxu0 0
        %654 = vmatpush2.bf16.msra.mxu0 0
        %655 = vmatprep.subr.bf16.mxu0 0
        %656 = vmatpush2.bf16.msra.mxu0 0
        %657 = vmatprep.subr.bf16.mxu0 0
        %658 = vmatpush2.bf16.msra.mxu0 0
        %659 = vmatprep.subr.bf16.mxu0 0
        %660 = vmatpush2.bf16.msra.mxu0 0
        %661 = vmatprep.subr.bf16.mxu0 0
        %662 = vmatpush2.bf16.msra.mxu0 0
        %663 = vmatprep.subr.bf16.mxu0 0
        %664 = vmatpush2.bf16.msra.mxu0 0
        %665 = vmatprep.mubr.bf16.mxu0 0
        %666 = vmatmul.mubr.bf16.gmra.mxu0 %v567
        %v667 = vpop.f32.mrf.mxu0
        %v668 = vadd.f32 %v619, %v667
        %v669 = vpop.f32.mrf.mxu0
        %v670 = vpop.f32.mrf.mxu0
        %v671 = vadd.f32 %v619, %v670
        %v672 = vpop.f32.mrf.mxu0
        %673 = vdwg.mxu0
        %v674 = vld [vmem:[#allocation8] sm:$0xf]
        %v675 = vld [vmem:[#allocation8 + $0x4] sm:$0xf]
        %v676 = vld [vmem:[#allocation8 + $0x8] sm:$0xf]
        %v677 = vld [vmem:[#allocation8 + $0xc] sm:$0xf]
        %v678 = vld [vmem:[%s8] sm:$0x1]
        %v680 = vlaneseq
        %v681 = vshrl.u32 %v680, 7
        %v682 = vsub.s32 0, %v681
        %v683 = vrot.slane %v678, %v682
        %v689 = vunpack.c.l.b16 %v674
        %v690 = vunpack.c.l.b16 %v675
        %v691 = vunpack.c.l.b16 %v676
        %v692 = vunpack.c.l.b16 %v677
        %v693 = vpack.c.b16 %v690, %v689
        %v694 = vpack.c.b16 %v692, %v691
        %697 = vmatprep.subr.bf16.mxu0 0
        %698 = vmatpush1.bf16.msra.mxu0 0
        %699 = vmatprep.subr.bf16.mxu0 0
        %700 = vmatpush1.bf16.msra.mxu0 0
        %701 = vmatprep.subr.bf16.mxu0 0
        %702 = vmatpush1.bf16.msra.mxu0 0
        %703 = vmatprep.subr.bf16.mxu0 0
        %704 = vmatpush1.bf16.msra.mxu0 0
        %705 = vmatprep.subr.bf16.mxu0 0
        %706 = vmatpush1.bf16.msra.mxu0 0
        %707 = vmatprep.subr.bf16.mxu0 0
        %708 = vmatpush1.bf16.msra.mxu0 0
        %709 = vmatprep.subr.bf16.mxu0 0
        %710 = vmatpush1.bf16.msra.mxu0 %v694
        %711 = vmatprep.subr.bf16.mxu0 0
        %712 = vmatpush1.bf16.msra.mxu0 %v693
        %713 = vmatprep.subr.bf16.mxu0 0
        %714 = vmatpush2.bf16.msra.mxu0 0
        %715 = vmatprep.subr.bf16.mxu0 0
        %716 = vmatpush2.bf16.msra.mxu0 0
        %717 = vmatprep.subr.bf16.mxu0 0
        %718 = vmatpush2.bf16.msra.mxu0 0
        %719 = vmatprep.subr.bf16.mxu0 0
        %720 = vmatpush2.bf16.msra.mxu0 0
        %721 = vmatprep.subr.bf16.mxu0 0
        %722 = vmatpush2.bf16.msra.mxu0 0
        %723 = vmatprep.subr.bf16.mxu0 0
        %724 = vmatpush2.bf16.msra.mxu0 0
        %725 = vmatprep.subr.bf16.mxu0 0
        %726 = vmatpush2.bf16.msra.mxu0 0
        %727 = vmatprep.subr.bf16.mxu0 0
        %728 = vmatpush2.bf16.msra.mxu0 0
        %729 = vmatprep.mubr.bf16.mxu0 0
        %730 = vmatmul.mubr.bf16.gmra.mxu0 %v567
        %v731 = vpop.f32.mrf.mxu0
        %v732 = vadd.f32 %v683, %v731
        %v733 = vpop.f32.mrf.mxu0
        %v734 = vpop.f32.mrf.mxu0
        %v735 = vadd.f32 %v683, %v734
        %v736 = vpop.f32.mrf.mxu0
        %737 = vdwg.mxu0
        %v738 = vmul.f32 %v604, 0.25
        %v739 = vmul.f32 %v607, 0.25
        %v740 = vpack.c.bf16 %v739, %v738
        %v742 = vunpack.c.l.b16 %v740
        %v743 = vunpack.c.h.b16 %v740
        %v744 = vpack.c.b16 %v742, %v742
        %v745 = vpack.c.b16 %v743, %v743
        %vm748 = vcmask 257024
        %749 = vst.msk [vmem:[%s474] sm:$0xf] %vm748, %v744
        %750 = vst.msk [vmem:[%s474 + $0x4] sm:$0xf] %vm748, %v745
        %v751 = vpack.c.bf16 %v671, %v668
        %v753 = vunpack.c.l.b16 %v751
        %v754 = vunpack.c.h.b16 %v751
        %v755 = vpack.c.b16 %v753, %v753
        %v756 = vpack.c.b16 %v754, %v754
        %759 = vst.msk [vmem:[%s481] sm:$0xf] %vm748, %v755
        %760 = vst.msk [vmem:[%s481 + $0x4] sm:$0xf] %vm748, %v756
        %v761 = vpack.c.bf16 %v735, %v732
        %v763 = vunpack.c.l.b16 %v761
        %v764 = vunpack.c.h.b16 %v761
        %v765 = vpack.c.b16 %v763, %v763
        %v766 = vpack.c.b16 %v764, %v764
        %769 = vst.msk [vmem:[%s488] sm:$0xf] %vm748, %v765
        %770 = vst.msk [vmem:[%s488 + $0x4] sm:$0xf] %vm748, %v766
        %s771 = sand.u32 %s252, 1
        %s772 = scalar_lea.sflag [#allocation4], %s771
        %s773 = sand.u32 %s252, 1
        %s774 = smul.addr %s773, 8
        %s775 = scalar_lea.vmem [#allocation10], %s774
        %s776 = sand.u32 %s34, 1
        %s777 = scalar_lea.sflag [#allocation12], %s776
        %s778 = sand.u32 %s280, 1
        %s779 = smul.addr %s778, 8
        %s780 = scalar_lea.vmem [#allocation11], %s779
        %s781 = sand.u32 %s34, 1
        %s782 = scalar_lea.sflag [#allocation12], %s781
        %s783 = sand.u32 %s308, 1
        %s784 = smul.addr %s783, 8
        %s785 = scalar_lea.vmem [#allocation13], %s784
        // Predicated region
        $region73: #{tpu_custom_call.1} parent=55 // pred_check
          %p786 = pneg %p262
        $region74: #{tpu_custom_call.1} parent=55 // pred_check_branch
          %788 = sbr.rel (%p786) target = $region76
        $region75: #{tpu_custom_call.1} parent=55 // pred_region
          %s789 = smul.u32 2, %s39
          %s791 = ssub.s32 128, 128
          %792 = vsyncadd %s772, %s791
          %s793 = smul.addr %s38, 4
          %s794 = sadd.s32 %s789, %s793
          %s795 = smul.addr %s794, 64
          %s796 = scalar_lea.hbm %s9, %s795
          %s797 = sshll.u32 %s775, 4
          %s798 = int_to_ptr.vmem [resolvable:$true] %s797
          %803 = dma.vmem_to_hbm [thread:$0]  %s798, 128, %s796, %s772, 64, 64, 4
        $region76: #{tpu_custom_call.1} parent=55 // pred_fallthru
          _
        // Predicated region
        $region77: #{tpu_custom_call.1} parent=55 // pred_check
          %p804 = pneg %p290
        $region78: #{tpu_custom_call.1} parent=55 // pred_check_branch
          %806 = sbr.rel (%p804) target = $region80
        $region79: #{tpu_custom_call.1} parent=55 // pred_region
          %s807 = smul.u32 2, %s39
          %s809 = ssub.s32 128, 128
          %810 = vsyncadd %s777, %s809
          %s811 = smul.addr %s38, 4
          %s812 = sadd.s32 %s807, %s811
          %s813 = smul.addr %s812, 64
          %s814 = scalar_lea.hbm %s10, %s813
          %s815 = sshll.u32 %s780, 4
          %s816 = int_to_ptr.vmem [resolvable:$true] %s815
          %821 = dma.vmem_to_hbm [thread:$0]  %s816, 128, %s814, %s777, 64, 64, 4
        $region80: #{tpu_custom_call.1} parent=55 // pred_fallthru
          _
        // Predicated region
        $region81: #{tpu_custom_call.1} parent=55 // pred_check
          %p822 = pneg %p318
        $region82: #{tpu_custom_call.1} parent=55 // pred_check_branch
          %824 = sbr.rel (%p822) target = $region84
        $region83: #{tpu_custom_call.1} parent=55 // pred_region
          %s825 = smul.u32 2, %s39
          %s827 = ssub.s32 128, 128
          %828 = vsyncadd %s782, %s827
          %s829 = smul.addr %s38, 4
          %s830 = sadd.s32 %s825, %s829
          %s831 = smul.addr %s830, 64
          %s832 = scalar_lea.hbm %s11, %s831
          %s833 = sshll.u32 %s785, 4
          %s834 = int_to_ptr.vmem [resolvable:$true] %s833
          %839 = dma.vmem_to_hbm [thread:$0]  %s834, 128, %s832, %s782, 64, 64, 4
        $region84: #{tpu_custom_call.1} parent=55 // pred_fallthru
          _
      $region56: #{tpu_custom_call.1} parent=5 // pred_fallthru
        _
      %p840 = scmp.le.s32.totalorder 2, %s29
      // Predicated region
      $region85: #{tpu_custom_call.1} parent=5 // pred_check
        %p841 = pneg %p840
      $region86: #{tpu_custom_call.1} parent=5 // pred_check_branch
        %843 = sbr.rel (%p841) target = $region88
      $region87: #{tpu_custom_call.1} parent=5 // pred_region
        %s844 = ssub.s32 %s29, 2
        // Predicated region
        $region89: #{tpu_custom_call.1} parent=87 // pred_check
          %p845 = pneg %p268
        $region90: #{tpu_custom_call.1} parent=87 // pred_check_branch
          %847 = sbr.rel (%p845) target = $region92
        $region91: #{tpu_custom_call.1} parent=87 // pred_region
          %s848 = sand.u32 %s253, 1
          %s849 = scalar_lea.sflag [#allocation4], %s848
          %s850 = sand.u32 %s253, 1
          %s851 = smul.addr %s850, 8
          %s852 = scalar_lea.vmem [#allocation10], %s851
          %853 = dma.done %s849, 128
        $region92: #{tpu_custom_call.1} parent=87 // pred_fallthru
          _
        // Predicated region
        $region93: #{tpu_custom_call.1} parent=87 // pred_check
          %p854 = pneg %p296
        $region94: #{tpu_custom_call.1} parent=87 // pred_check_branch
          %856 = sbr.rel (%p854) target = $region96
        $region95: #{tpu_custom_call.1} parent=87 // pred_region
          %s857 = sand.u32 %s35, 1
          %s858 = scalar_lea.sflag [#allocation12], %s857
          %s859 = sand.u32 %s281, 1
          %s860 = smul.addr %s859, 8
          %s861 = scalar_lea.vmem [#allocation11], %s860
          %862 = dma.done %s858, 128
        $region96: #{tpu_custom_call.1} parent=87 // pred_fallthru
          _
        // Predicated region
        $region97: #{tpu_custom_call.1} parent=87 // pred_check
          %p863 = pneg %p324
        $region98: #{tpu_custom_call.1} parent=87 // pred_check_branch
          %865 = sbr.rel (%p863) target = $region100
        $region99: #{tpu_custom_call.1} parent=87 // pred_region
          %s866 = sand.u32 %s35, 1
          %s867 = scalar_lea.sflag [#allocation12], %s866
          %s868 = sand.u32 %s309, 1
          %s869 = smul.addr %s868, 8
          %s870 = scalar_lea.vmem [#allocation13], %s869
          %871 = dma.done %s867, 128
        $region100: #{tpu_custom_call.1} parent=87 // pred_fallthru
          _
      $region88: #{tpu_custom_call.1} parent=5 // pred_fallthru
        _
    $region6: #{tpu_custom_call.1} parent=1 // loop_footer
      %s33 = sadd.s32 1, %s29
    $region7: #{tpu_custom_call.1} parent=1 // loop_footer_branch
      %28 = sbr.rel target = $region3
    $region8: #{tpu_custom_call.1} parent=1 // loop_exit
      _
    %872 = vsyncpa [#allocation3], 1
    %s873 = scalar_lea.sflag [#allocation3], 1
    %874 = vsyncpa %s873, 1
    %875 = vsyncpa [#allocation6], 1
    %876 = vsyncpa [#allocation9], 1
    %877 = vsyncpa [#allocation4], 1
    %s878 = scalar_lea.sflag [#allocation4], 1
    %879 = vsyncpa %s878, 1
    %880 = vsyncpa [#allocation12], 1
    %s881 = scalar_lea.sflag [#allocation12], 1
    %882 = vsyncpa %s881, 1

// kernel: tpu_custom_call.1
$region0: #{tpu_custom_call.1}
  #allocation0 [shape = 'u32[]', space=smem, size = 0x4, offset = 0x4, fixed_abs, tag = 'smem constant byte address 0x4 - core index']
  #allocation1 [shape = 'u32[144,128]{1,0:T(1,128)}', space=vmem, size = 0x12000, scoped, tag = 'internal scratch']
  %s0 = inlined_call_operand.hbm [shape: f32[2,32,32], index: 0, kind: input, shape index: {}]
  %s1 = inlined_call_operand.vmem [shape: f32[1,32], index: 1, kind: input, shape index: {}]
  %s2 = inlined_call_operand.vmem [shape: f32[1,32], index: 2, kind: input, shape index: {}]
  %s3 = inlined_call_operand.hbm [shape: bf16[32,32], index: 3, kind: input, shape index: {}]
  %s4 = inlined_call_operand.vmem [shape: f32[1,32], index: 4, kind: input, shape index: {}]
  %s5 = inlined_call_operand.hbm [shape: bf16[32,32], index: 5, kind: input, shape index: {}]
  %s6 = inlined_call_operand.vmem [shape: f32[1,32], index: 6, kind: input, shape index: {}]
  %s7 = inlined_call_operand.hbm [shape: bf16[32,32], index: 7, kind: input, shape index: {}]
  %s8 = inlined_call_operand.vmem [shape: f32[1,32], index: 8, kind: input, shape index: {}]
  %s9 = inlined_call_operand.hbm [shape: bf16[2,32,32], index: 9, kind: output, shape index: {0}]
  %s10 = inlined_call_operand.hbm [shape: bf16[2,32,32], index: 10, kind: output, shape index: {1}]
  %s11 = inlined_call_operand.hbm [shape: bf16[2,32,32], index: 11, kind: output, shape index: {2}]
  %12 = xla_tuple %s9, %s10, %s11
  %s13 = sld [smem:[#allocation0]]
  $region101: #{tpu_custom_call.1} parent=0
    _
  %s15 = ssub.s32 1, %s13
  %s16 = scalar_select 0, %s15, %s13
  $region1: #{tpu_custom_call.1} parent=0
    #allocation2 [shape = 'u8[16384]{0}', space=vmem, size = 0x4000, scoped, tag = 'input window, operand 0']
    #allocation3 [shape = 's32[2]{0}', space=sflag, size = 0x8, scoped, tag = 'scoped memory for tpu_custom_call.1']
    #allocation4 [shape = 's32[2]{0}', space=sflag, size = 0x8, scoped, tag = 'scoped memory for tpu_custom_call.1']
    #allocation5 [shape = 'u8[8192]{0}', space=vmem, size = 0x2000, scoped, tag = 'input window, operand 3, single buffered']
    #allocation6 [shape = 's32[1]{0}', space=sflag, size = 0x4, scoped, tag = 'scoped memory for tpu_custom_call.1']
    #allocation7 [shape = 'u8[8192]{0}', space=vmem, size = 0x2000, scoped, tag = 'input window, operand 5, single buffered']
    #allocation8 [shape = 'u8[8192]{0}', space=vmem, size = 0x2000, scoped, tag = 'input window, operand 7, single buffered']
    #allocation9 [shape = 's32[1]{0}', space=sflag, size = 0x4, scoped, tag = 'scoped memory for tpu_custom_call.1']
    #allocation10 [shape = 'u8[8192]{0}', space=vmem, size = 0x2000, scoped, tag = 'output window, operand 0']
    #allocation11 [shape = 'u8[8192]{0}', space=vmem, size = 0x2000, scoped, tag = 'output window, operand 1']
    #allocation12 [shape = 's32[2]{0}', space=sflag, size = 0x8, scoped, tag = 'scoped memory for tpu_custom_call.1']
    #allocation13 [shape = 'u8[8192]{0}', space=vmem, size = 0x2000, scoped, tag = 'output window, operand 2']
    %17 = vsyncpa [#allocation3], 0
    %s18 = scalar_lea.sflag [#allocation3], 1
    %19 = vsyncpa %s18, 0
    %20 = vsyncpa [#allocation6], 0
    %21 = vsyncpa [#allocation9], 0
    %22 = vsyncpa [#allocation4], 0
    %s23 = scalar_lea.sflag [#allocation4], 1
    %24 = vsyncpa %s23, 0
    %25 = vsyncpa [#allocation12], 0
    %s26 = scalar_lea.sflag [#allocation12], 1
    %27 = vsyncpa %s26, 0
    loop: start=0, step=1, limit=6
    $region2: #{tpu_custom_call.1} parent=1 // loop_pre_header
      _
    $region3: #{tpu_custom_call.1} parent=1 // loop_header
      %s29 = sphi 0, %s33
      %p30 = scmp.ge.s32.totalorder %s29, 6
      %s36 = sphi 0, %s48
      %s37 = sphi 0, %s44
      %s38 = sphi 0, %s36
      %s39 = sphi 0, %s37
      %s40 = sphi 0, %s38
      %s41 = sphi 0, %s39
      %s53 = sphi 0, %s55
      %s56 = sphi 0, %s53
      %s57 = sphi 0, %s56
      %s73 = sphi 0, %s57
      %s77 = sphi 0, %s77
      %s79 = sphi 0, %s77
      %s80 = sphi 0, %s79
      %s94 = sphi 0, %s80
      %s98 = sphi 0, %s98
      %s100 = sphi 0, %s98
      %s101 = sphi 0, %s100
      %s115 = sphi 0, %s101
      %s119 = sphi 0, %s119
      %s121 = sphi 0, %s119
      %s122 = sphi 0, %s121
      %s136 = sphi 0, %s122
      %s140 = sphi 0, %s140
      %s142 = sphi 0, %s140
      %s143 = sphi 0, %s142
      %s157 = sphi 0, %s143
      %s161 = sphi 0, %s161
      %s163 = sphi 0, %s161
      %s164 = sphi 0, %s163
      %s178 = sphi 0, %s164
      %s182 = sphi 0, %s182
      %s184 = sphi 0, %s182
      %s185 = sphi 0, %s184
      %s199 = sphi 0, %s185
      %s203 = sphi 0, %s203
      %s205 = sphi 0, %s203
      %s206 = sphi 0, %s205
      %s220 = sphi 0, %s206
      %s224 = sphi 0, %s224
      %s226 = sphi 0, %s224
      %s227 = sphi 0, %s226
      %s241 = sphi 0, %s227
      %s249 = sphi 0, %s251
      %s252 = sphi 0, %s249
      %s253 = sphi 0, %s252
      %s269 = sphi 0, %s253
      %s277 = sphi 0, %s279
      %s280 = sphi 0, %s277
      %s281 = sphi 0, %s280
      %s297 = sphi 0, %s281
      %s305 = sphi 0, %s307
      %s308 = sphi 0, %s305
      %s309 = sphi 0, %s308
      %s325 = sphi 0, %s309
    $region4: #{tpu_custom_call.1} parent=1 // loop_header_branch
      %32 = sbr.rel (%p30) target = $region8
    $region5: #{tpu_custom_call.1} parent=1 // loop_body
      %s34 = ssub.s32 %s29, 1
      %s35 = ssub.s32 %s29, 2
      %s42 = sadd.s32 1, %s37
      %p43 = scmp.ge.s32.totalorder %s42, 2
      %s44 = scalar_select %p43, 0, %s42
      %s45 = sadd.s32 1, %s36
      %s46 = scalar_select %p43, %s45, %s36
      %p47 = scmp.ge.s32.totalorder %s46, 2
      %s48 = scalar_select %p47, 0, %s46
      %s49 = ssub.s32 %s36, %s48
      %s50 = ssub.s32 %s37, %s44
      %s51 = sor.u32 %s49, %s50
      %p52 = scmp.eq.s32.totalorder %s51, 0
      %s54 = sadd.s32 %s53, 1
      %s55 = scalar_select %p52, %s53, %s54
      %p58 = pneg %p52
      %p59 = scmp.eq.s32.totalorder %s29, 3
      %p60 = por %p58, %p59
      %p61 = scmp.ne.s32.totalorder %s53, %s56
      %p62 = scmp.eq.s32.totalorder %s29, 0
      %p63 = por %p61, %p62
      %p64 = scmp.ne.s32.totalorder %s53, %s56
      %p65 = scmp.eq.s32.totalorder %s34, 3
      %p66 = por %p64, %p65
      %p67 = scmp.ne.s32.totalorder %s56, %s57
      %p68 = scmp.eq.s32.totalorder %s34, 0
      %p69 = por %p67, %p68
      %p70 = scmp.ne.s32.totalorder %s56, %s57
      %p71 = scmp.eq.s32.totalorder %s35, 3
      %p72 = por %p70, %p71
      %p74 = scmp.ne.s32.totalorder %s57, %s73
      %p75 = scmp.eq.s32.totalorder %s35, 0
      %p76 = por %p74, %p75
      %s78 = sadd.s32 %s77, 1
      %p81 = scmp.eq.s32.totalorder %s29, 3
      %p82 = scmp.ne.s32.totalorder %s77, %s79
      %p83 = scmp.eq.s32.totalorder %s29, 0
      %p84 = por %p82, %p83
      %p85 = scmp.ne.s32.totalorder %s77, %s79
      %p86 = scmp.eq.s32.totalorder %s34, 3
      %p87 = por %p85, %p86
      %p88 = scmp.ne.s32.totalorder %s79, %s80
      %p89 = scmp.eq.s32.totalorder %s34, 0
      %p90 = por %p88, %p89
      %p91 = scmp.ne.s32.totalorder %s79, %s80
      %p92 = scmp.eq.s32.totalorder %s35, 3
      %p93 = por %p91, %p92
      %p95 = scmp.ne.s32.totalorder %s80, %s94
      %p96 = scmp.eq.s32.totalorder %s35, 0
      %p97 = por %p95, %p96
      %s99 = sadd.s32 %s98, 1
      %p102 = scmp.eq.s32.totalorder %s29, 3
      %p103 = scmp.ne.s32.totalorder %s98, %s100
      %p104 = scmp.eq.s32.totalorder %s29, 0
      %p105 = por %p103, %p104
      %p106 = scmp.ne.s32.totalorder %s98, %s100
      %p107 = scmp.eq.s32.totalorder %s34, 3
      %p108 = por %p106, %p107
      %p109 = scmp.ne.s32.totalorder %s100, %s101
      %p110 = scmp.eq.s32.totalorder %s34, 0
      %p111 = por %p109, %p110
      %p112 = scmp.ne.s32.totalorder %s100, %s101
      %p113 = scmp.eq.s32.totalorder %s35, 3
      %p114 = por %p112, %p113
      %p116 = scmp.ne.s32.totalorder %s101, %s115
      %p117 = scmp.eq.s32.totalorder %s35, 0
      %p118 = por %p116, %p117
      %s120 = sadd.s32 %s119, 1
      %p123 = scmp.eq.s32.totalorder %s29, 3
      %p124 = scmp.ne.s32.totalorder %s119, %s121
      %p125 = scmp.eq.s32.totalorder %s29, 0
      %p126 = por %p124, %p125
      %p127 = scmp.ne.s32.totalorder %s119, %s121
      %p128 = scmp.eq.s32.totalorder %s34, 3
      %p129 = por %p127, %p128
      %p130 = scmp.ne.s32.totalorder %s121, %s122
      %p131 = scmp.eq.s32.totalorder %s34, 0
      %p132 = por %p130, %p131
      %p133 = scmp.ne.s32.totalorder %s121, %s122
      %p134 = scmp.eq.s32.totalorder %s35, 3
      %p135 = por %p133, %p134
      %p137 = scmp.ne.s32.totalorder %s122, %s136
      %p138 = scmp.eq.s32.totalorder %s35, 0
      %p139 = por %p137, %p138
      %s141 = sadd.s32 %s140, 1
      %p144 = scmp.eq.s32.totalorder %s29, 3
      %p145 = scmp.ne.s32.totalorder %s140, %s142
      %p146 = scmp.eq.s32.totalorder %s29, 0
      %p147 = por %p145, %p146
      %p148 = scmp.ne.s32.totalorder %s140, %s142
      %p149 = scmp.eq.s32.totalorder %s34, 3
      %p150 = por %p148, %p149
      %p151 = scmp.ne.s32.totalorder %s142, %s143
      %p152 = scmp.eq.s32.totalorder %s34, 0
      %p153 = por %p151, %p152
      %p154 = scmp.ne.s32.totalorder %s142, %s143
      %p155 = scmp.eq.s32.totalorder %s35, 3
      %p156 = por %p154, %p155
      %p158 = scmp.ne.s32.totalorder %s143, %s157
      %p159 = scmp.eq.s32.totalorder %s35, 0
      %p160 = por %p158, %p159
      %s162 = sadd.s32 %s161, 1
      %p165 = scmp.eq.s32.totalorder %s29, 3
      %p166 = scmp.ne.s32.totalorder %s161, %s163
      %p167 = scmp.eq.s32.totalorder %s29, 0
      %p168 = por %p166, %p167
      %p169 = scmp.ne.s32.totalorder %s161, %s163
      %p170 = scmp.eq.s32.totalorder %s34, 3
      %p171 = por %p169, %p170
      %p172 = scmp.ne.s32.totalorder %s163, %s164
      %p173 = scmp.eq.s32.totalorder %s34, 0
      %p174 = por %p172, %p173
      %p175 = scmp.ne.s32.totalorder %s163, %s164
      %p176 = scmp.eq.s32.totalorder %s35, 3
      %p177 = por %p175, %p176
      %p179 = scmp.ne.s32.totalorder %s164, %s178
      %p180 = scmp.eq.s32.totalorder %s35, 0
      %p181 = por %p179, %p180
      %s183 = sadd.s32 %s182, 1
      %p186 = scmp.eq.s32.totalorder %s29, 3
      %p187 = scmp.ne.s32.totalorder %s182, %s184
      %p188 = scmp.eq.s32.totalorder %s29, 0
      %p189 = por %p187, %p188
      %p190 = scmp.ne.s32.totalorder %s182, %s184
      %p191 = scmp.eq.s32.totalorder %s34, 3
      %p192 = por %p190, %p191
      %p193 = scmp.ne.s32.totalorder %s184, %s185
      %p194 = scmp.eq.s32.totalorder %s34, 0
      %p195 = por %p193, %p194
      %p196 = scmp.ne.s32.totalorder %s184, %s185
      %p197 = scmp.eq.s32.totalorder %s35, 3
      %p198 = por %p196, %p197
      %p200 = scmp.ne.s32.totalorder %s185, %s199
      %p201 = scmp.eq.s32.totalorder %s35, 0
      %p202 = por %p200, %p201
      %s204 = sadd.s32 %s203, 1
      %p207 = scmp.eq.s32.totalorder %s29, 3
      %p208 = scmp.ne.s32.totalorder %s203, %s205
      %p209 = scmp.eq.s32.totalorder %s29, 0
      %p210 = por %p208, %p209
      %p211 = scmp.ne.s32.totalorder %s203, %s205
      %p212 = scmp.eq.s32.totalorder %s34, 3
      %p213 = por %p211, %p212
      %p214 = scmp.ne.s32.totalorder %s205, %s206
      %p215 = scmp.eq.s32.totalorder %s34, 0
      %p216 = por %p214, %p215
      %p217 = scmp.ne.s32.totalorder %s205, %s206
      %p218 = scmp.eq.s32.totalorder %s35, 3
      %p219 = por %p217, %p218
      %p221 = scmp.ne.s32.totalorder %s206, %s220
      %p222 = scmp.eq.s32.totalorder %s35, 0
      %p223 = por %p221, %p222
      %s225 = sadd.s32 %s224, 1
      %p228 = scmp.eq.s32.totalorder %s29, 3
      %p229 = scmp.ne.s32.totalorder %s224, %s226
      %p230 = scmp.eq.s32.totalorder %s29, 0
      %p231 = por %p229, %p230
      %p232 = scmp.ne.s32.totalorder %s224, %s226
      %p233 = scmp.eq.s32.totalorder %s34, 3
      %p234 = por %p232, %p233
      %p235 = scmp.ne.s32.totalorder %s226, %s227
      %p236 = scmp.eq.s32.totalorder %s34, 0
      %p237 = por %p235, %p236
      %p238 = scmp.ne.s32.totalorder %s226, %s227
      %p239 = scmp.eq.s32.totalorder %s35, 3
      %p240 = por %p238, %p239
      %p242 = scmp.ne.s32.totalorder %s227, %s241
      %p243 = scmp.eq.s32.totalorder %s35, 0
      %p244 = por %p242, %p243
      %s245 = ssub.s32 %s36, %s48
      %s246 = ssub.s32 %s37, %s44
      %s247 = sor.u32 %s245, %s246
      %p248 = scmp.eq.s32.totalorder %s247, 0
      %s250 = sadd.s32 %s249, 1
      %s251 = scalar_select %p248, %s249, %s250
      %p254 = pneg %p248
      %p255 = scmp.eq.s32.totalorder %s29, 3
      %p256 = por %p254, %p255
      %p257 = scmp.ne.s32.totalorder %s249, %s252
      %p258 = scmp.eq.s32.totalorder %s29, 0
      %p259 = por %p257, %p258
      %p260 = scmp.ne.s32.totalorder %s249, %s252
      %p261 = scmp.eq.s32.totalorder %s34, 3
      %p262 = por %p260, %p261
      %p263 = scmp.ne.s32.totalorder %s252, %s253
      %p264 = scmp.eq.s32.totalorder %s34, 0
      %p265 = por %p263, %p264
      %p266 = scmp.ne.s32.totalorder %s252, %s253
      %p267 = scmp.eq.s32.totalorder %s35, 3
      %p268 = por %p266, %p267
      %p270 = scmp.ne.s32.totalorder %s253, %s269
      %p271 = scmp.eq.s32.totalorder %s35, 0
      %p272 = por %p270, %p271
      %s273 = ssub.s32 %s36, %s48
      %s274 = ssub.s32 %s37, %s44
      %s275 = sor.u32 %s273, %s274
      %p276 = scmp.eq.s32.totalorder %s275, 0
      %s278 = sadd.s32 %s277, 1
      %s279 = scalar_select %p276, %s277, %s278
      %p282 = pneg %p276
      %p283 = scmp.eq.s32.totalorder %s29, 3
      %p284 = por %p282, %p283
      %p285 = scmp.ne.s32.totalorder %s277, %s280
      %p286 = scmp.eq.s32.totalorder %s29, 0
      %p287 = por %p285, %p286
      %p288 = scmp.ne.s32.totalorder %s277, %s280
      %p289 = scmp.eq.s32.totalorder %s34, 3
      %p290 = por %p288, %p289
      %p291 = scmp.ne.s32.totalorder %s280, %s281
      %p292 = scmp.eq.s32.totalorder %s34, 0
      %p293 = por %p291, %p292
      %p294 = scmp.ne.s32.totalorder %s280, %s281
      %p295 = scmp.eq.s32.totalorder %s35, 3
      %p296 = por %p294, %p295
      %p298 = scmp.ne.s32.totalorder %s281, %s297
      %p299 = scmp.eq.s32.totalorder %s35, 0
      %p300 = por %p298, %p299
      %s301 = ssub.s32 %s36, %s48
      %s302 = ssub.s32 %s37, %s44
      %s303 = sor.u32 %s301, %s302
      %p304 = scmp.eq.s32.totalorder %s303, 0
      %s306 = sadd.s32 %s305, 1
      %s307 = scalar_select %p304, %s305, %s306
      %p310 = pneg %p304
      %p311 = scmp.eq.s32.totalorder %s29, 3
      %p312 = por %p310, %p311
      %p313 = scmp.ne.s32.totalorder %s305, %s308
      %p314 = scmp.eq.s32.totalorder %s29, 0
      %p315 = por %p313, %p314
      %p316 = scmp.ne.s32.totalorder %s305, %s308
      %p317 = scmp.eq.s32.totalorder %s34, 3
      %p318 = por %p316, %p317
      %p319 = scmp.ne.s32.totalorder %s308, %s309
      %p320 = scmp.eq.s32.totalorder %s34, 0
      %p321 = por %p319, %p320
      %p322 = scmp.ne.s32.totalorder %s308, %s309
      %p323 = scmp.eq.s32.totalorder %s35, 3
      %p324 = por %p322, %p323
      %p326 = scmp.ne.s32.totalorder %s309, %s325
      %p327 = scmp.eq.s32.totalorder %s35, 0
      %p328 = por %p326, %p327
      %p329 = scmp.le.s32.totalorder 1, %s29
      %p330 = scmp.lt.s32.totalorder %s29, 5
      %p331 = pnand %p329, %p330
      %p332 = pneg %p331
      // Predicated region
      $region9: #{tpu_custom_call.1} parent=5 // pred_check
        _
      $region10: #{tpu_custom_call.1} parent=5 // pred_check_branch
        %334 = sbr.rel (%p331) target = $region12
      $region11: #{tpu_custom_call.1} parent=5 // pred_region
        %s335 = ssub.s32 %s29, 1
        // Predicated region
        $region13: #{tpu_custom_call.1} parent=11 // pred_check
          %p336 = pneg %p90
        $region14: #{tpu_custom_call.1} parent=11 // pred_check_branch
          %338 = sbr.rel (%p336) target = $region16
        $region15: #{tpu_custom_call.1} parent=11 // pred_region
          _
        $region16: #{tpu_custom_call.1} parent=11 // pred_fallthru
          _
        // Predicated region
        $region17: #{tpu_custom_call.1} parent=11 // pred_check
          %p339 = pneg %p111
        $region18: #{tpu_custom_call.1} parent=11 // pred_check_branch
          %341 = sbr.rel (%p339) target = $region20
        $region19: #{tpu_custom_call.1} parent=11 // pred_region
          _
        $region20: #{tpu_custom_call.1} parent=11 // pred_fallthru
          _
        // Predicated region
        $region21: #{tpu_custom_call.1} parent=11 // pred_check
          %p342 = pneg %p132
        $region22: #{tpu_custom_call.1} parent=11 // pred_check_branch
          %344 = sbr.rel (%p342) target = $region24
        $region23: #{tpu_custom_call.1} parent=11 // pred_region
          %s346 = ssub.s32 256, 256
          %347 = vsyncadd [#allocation6], %s346
          %s348 = sshll.u32 [#allocation5], 4
          %s349 = int_to_ptr.vmem [resolvable:$true] %s348
          %354 = dma.hbm_to_vmem [thread:$0]  %s3, 256, %s349, [#allocation6], 64, 64, 4
        $region24: #{tpu_custom_call.1} parent=11 // pred_fallthru
          _
        // Predicated region
        $region25: #{tpu_custom_call.1} parent=11 // pred_check
          %p355 = pneg %p153
        $region26: #{tpu_custom_call.1} parent=11 // pred_check_branch
          %357 = sbr.rel (%p355) target = $region28
        $region27: #{tpu_custom_call.1} parent=11 // pred_region
          _
        $region28: #{tpu_custom_call.1} parent=11 // pred_fallthru
          _
        // Predicated region
        $region29: #{tpu_custom_call.1} parent=11 // pred_check
          %p358 = pneg %p174
        $region30: #{tpu_custom_call.1} parent=11 // pred_check_branch
          %360 = sbr.rel (%p358) target = $region32
        $region31: #{tpu_custom_call.1} parent=11 // pred_region
          %s362 = ssub.s32 256, 256
          %363 = vsyncadd [#allocation6], %s362
          %s364 = sshll.u32 [#allocation7], 4
          %s365 = int_to_ptr.vmem [resolvable:$true] %s364
          %370 = dma.hbm_to_vmem [thread:$0]  %s5, 256, %s365, [#allocation6], 64, 64, 4
        $region32: #{tpu_custom_call.1} parent=11 // pred_fallthru
          _
        // Predicated region
        $region33: #{tpu_custom_call.1} parent=11 // pred_check
          %p371 = pneg %p195
        $region34: #{tpu_custom_call.1} parent=11 // pred_check_branch
          %373 = sbr.rel (%p371) target = $region36
        $region35: #{tpu_custom_call.1} parent=11 // pred_region
          _
        $region36: #{tpu_custom_call.1} parent=11 // pred_fallthru
          _
        // Predicated region
        $region37: #{tpu_custom_call.1} parent=11 // pred_check
          %p374 = pneg %p216
        $region38: #{tpu_custom_call.1} parent=11 // pred_check_branch
          %376 = sbr.rel (%p374) target = $region40
        $region39: #{tpu_custom_call.1} parent=11 // pred_region
          %s378 = ssub.s32 256, 256
          %379 = vsyncadd [#allocation9], %s378
          %s380 = sshll.u32 [#allocation8], 4
          %s381 = int_to_ptr.vmem [resolvable:$true] %s380
          %386 = dma.hbm_to_vmem [thread:$0]  %s7, 256, %s381, [#allocation9], 64, 64, 4
        $region40: #{tpu_custom_call.1} parent=11 // pred_fallthru
          _
        // Predicated region
        $region41: #{tpu_custom_call.1} parent=11 // pred_check
          %p387 = pneg %p237
        $region42: #{tpu_custom_call.1} parent=11 // pred_check_branch
          %389 = sbr.rel (%p387) target = $region44
        $region43: #{tpu_custom_call.1} parent=11 // pred_region
          _
        $region44: #{tpu_custom_call.1} parent=11 // pred_fallthru
          _
      $region12: #{tpu_custom_call.1} parent=5 // pred_fallthru
        _
      %p390 = scmp.lt.s32.totalorder %s29, 4
      // Predicated region
      $region45: #{tpu_custom_call.1} parent=5 // pred_check
        %p391 = pneg %p390
      $region46: #{tpu_custom_call.1} parent=5 // pred_check_branch
        %393 = sbr.rel (%p391) target = $region48
      $region47: #{tpu_custom_call.1} parent=5 // pred_region
        // Predicated region
        $region49: #{tpu_custom_call.1} parent=47 // pred_check
          %p394 = pneg %p63
        $region50: #{tpu_custom_call.1} parent=47 // pred_check_branch
          %396 = sbr.rel (%p394) target = $region52
        $region51: #{tpu_custom_call.1} parent=47 // pred_region
          %s397 = sand.u32 %s53, 1
          %s398 = scalar_lea.sflag [#allocation3], %s397
          %s399 = sand.u32 %s53, 1
          %s400 = smul.addr %s399, 16
          %s401 = scalar_lea.vmem [#allocation2], %s400
          %s402 = smul.u32 2, %s37
          %s404 = ssub.s32 256, 256
          %405 = vsyncadd %s398, %s404
          %s406 = smul.addr %s36, 4
          %s407 = sadd.s32 %s402, %s406
          %s408 = smul.addr %s407, 128
          %s409 = scalar_lea.hbm %s0, %s408
          %s410 = sshll.u32 %s401, 4
          %s411 = int_to_ptr.vmem [resolvable:$true] %s410
          %416 = dma.hbm_to_vmem [thread:$0]  %s409, 256, %s411, %s398, 128, 128, 8
        $region52: #{tpu_custom_call.1} parent=47 // pred_fallthru
          _
      $region48: #{tpu_custom_call.1} parent=5 // pred_fallthru
        _
      %p417 = scmp.le.s32.totalorder 1, %s29
      %p418 = scmp.lt.s32.totalorder %s29, 5
      %p419 = pnand %p417, %p418
      %p420 = pneg %p419
      // Predicated region
      $region53: #{tpu_custom_call.1} parent=5 // pred_check
        _
      $region54: #{tpu_custom_call.1} parent=5 // pred_check_branch
        %422 = sbr.rel (%p419) target = $region56
      $region55: #{tpu_custom_call.1} parent=5 // pred_region
        %s423 = ssub.s32 %s29, 1
        %s424 = sand.u32 %s56, 1
        %s425 = scalar_lea.sflag [#allocation3], %s424
        %s426 = sand.u32 %s56, 1
        %s427 = smul.addr %s426, 16
        %s428 = scalar_lea.vmem [#allocation2], %s427
        // Predicated region
        $region57: #{tpu_custom_call.1} parent=55 // pred_check
          %p429 = pneg %p69
        $region58: #{tpu_custom_call.1} parent=55 // pred_check_branch
          %431 = sbr.rel (%p429) target = $region60
        $region59: #{tpu_custom_call.1} parent=55 // pred_region
          %432 = dma.done %s425, 256
        $region60: #{tpu_custom_call.1} parent=55 // pred_fallthru
          _
        // Predicated region
        $region61: #{tpu_custom_call.1} parent=55 // pred_check
          %p433 = pneg %p132
        $region62: #{tpu_custom_call.1} parent=55 // pred_check_branch
          %435 = sbr.rel (%p433) target = $region64
        $region63: #{tpu_custom_call.1} parent=55 // pred_region
          %436 = dma.done [#allocation6], 256
        $region64: #{tpu_custom_call.1} parent=55 // pred_fallthru
          _
        // Predicated region
        $region65: #{tpu_custom_call.1} parent=55 // pred_check
          %p437 = pneg %p174
        $region66: #{tpu_custom_call.1} parent=55 // pred_check_branch
          %439 = sbr.rel (%p437) target = $region68
        $region67: #{tpu_custom_call.1} parent=55 // pred_region
          %440 = dma.done [#allocation6], 256
        $region68: #{tpu_custom_call.1} parent=55 // pred_fallthru
          _
        // Predicated region
        $region69: #{tpu_custom_call.1} parent=55 // pred_check
          %p441 = pneg %p216
        $region70: #{tpu_custom_call.1} parent=55 // pred_check_branch
          %443 = sbr.rel (%p441) target = $region72
        $region71: #{tpu_custom_call.1} parent=55 // pred_region
          %444 = dma.done [#allocation9], 256
        $region72: #{tpu_custom_call.1} parent=55 // pred_fallthru
          _
        %s445 = sand.u32 %s56, 1
        %s446 = scalar_lea.sflag [#allocation3], %s445
        %s447 = sand.u32 %s56, 1
        %s448 = smul.addr %s447, 16
        %s449 = scalar_lea.vmem [#allocation2], %s448
        %p450 = pneg %p69
        %p451 = pneg %p66
        %p452 = pneg %p90
        %p453 = pneg %p87
        %p454 = pneg %p111
        %p455 = pneg %p108
        %p456 = pneg %p132
        %p457 = pneg %p129
        %p458 = pneg %p153
        %p459 = pneg %p150
        %p460 = pneg %p174
        %p461 = pneg %p171
        %p462 = pneg %p195
        %p463 = pneg %p192
        %p464 = pneg %p216
        %p465 = pneg %p213
        %p466 = pneg %p237
        %p467 = pneg %p234
        %p468 = pneg %p265
        %p469 = pneg %p262
        %s470 = sand.u32 %s252, 1
        %s471 = scalar_lea.sflag [#allocation4], %s470
        %s472 = sand.u32 %s252, 1
        %s473 = smul.addr %s472, 8
        %s474 = scalar_lea.vmem [#allocation10], %s473
        %p475 = pneg %p293
        %p476 = pneg %p290
        %s477 = sand.u32 %s34, 1
        %s478 = scalar_lea.sflag [#allocation12], %s477
        %s479 = sand.u32 %s280, 1
        %s480 = smul.addr %s479, 8
        %s481 = scalar_lea.vmem [#allocation11], %s480
        %p482 = pneg %p321
        %p483 = pneg %p318
        %s484 = sand.u32 %s34, 1
        %s485 = scalar_lea.sflag [#allocation12], %s484
        %s486 = sand.u32 %s308, 1
        %s487 = smul.addr %s486, 8
        %s488 = scalar_lea.vmem [#allocation13], %s487
        %s489 = smul.u32 2, %s39
        %s490 = smul.u32 2, %s39
        %s491 = smul.u32 2, %s39
        %s492 = smul.u32 2, %s39
        %v494 = vld [vmem:[%s428] sm:$0xff]
        %v495 = vld [vmem:[%s428 + $0x8] sm:$0xff]
        %v496 = vld [vmem:[%s1] sm:$0x1]
        %v497 = vld [vmem:[%s2] sm:$0x1]
        %vm498 = vcmask 261120
        %v499 = vsel %vm498, %v494, 0.0
        %500 = vadd.xlane.f32.xlu0 %v499
        %v501 = vpop.xlane.xlu0 %500
        %v502 = vsel %vm498, %v495, 0.0
        %503 = vadd.xlane.f32.xlu0 %v502
        %v504 = vpop.xlane.xlu0 %503
        %v505 = vrcp.pop 32.0
        %v506 = vmul.f32 %v501, %v505
        %v507 = vmul.f32 %v504, %v505
        %v508 = vsub.f32 %v494, %v506
        %v509 = vsub.f32 %v495, %v507
        %v510 = vmul.f32 %v508, %v508
        %v511 = vmul.f32 %v509, %v509
        %v512 = vsel %vm498, %v510, 0.0
        %513 = vadd.xlane.f32.xlu0 %v512
        %v514 = vpop.xlane.xlu0 %513
        %v515 = vsel %vm498, %v511, 0.0
        %516 = vadd.xlane.f32.xlu0 %v515
        %v517 = vpop.xlane.xlu0 %516
        %v518 = vmul.f32 %v514, %v505
        %v519 = vmul.f32 %v517, %v505
        %v520 = vadd.f32 %v518, 1e-06
        %v521 = vadd.f32 %v519, 1e-06
        %v522 = vrsqrt.pop %v520
        %v523 = vrsqrt.pop %v521
        %v524 = vmul.f32 %v508, %v522
        %v525 = vmul.f32 %v509, %v523
        %v527 = vlaneseq
        %v528 = vshrl.u32 %v527, 7
        %v529 = vsub.s32 0, %v528
        %v530 = vrot.slane %v496, %v529
        %v532 = vmul.f32 %v524, %v530
        %v533 = vmul.f32 %v525, %v530
        %v535 = vlaneseq
        %v536 = vshrl.u32 %v535, 7
        %v537 = vsub.s32 0, %v536
        %v538 = vrot.slane %v497, %v537
        %v540 = vadd.f32 %v532, %v538
        %v541 = vadd.f32 %v533, %v538
        %v542 = vpack.c.bf16 %v541, %v540
        %v543 = vld [vmem:[#allocation5] sm:$0xf]
        %v544 = vld [vmem:[#allocation5 + $0x4] sm:$0xf]
        %v545 = vld [vmem:[#allocation5 + $0x8] sm:$0xf]
        %v546 = vld [vmem:[#allocation5 + $0xc] sm:$0xf]
        %v547 = vld [vmem:[%s4] sm:$0x1]
        %v549 = vlaneseq
        %v550 = vshrl.u32 %v549, 7
        %v551 = vsub.s32 0, %v550
        %v552 = vrot.slane %v547, %v551
        %v558 = vunpack.c.l.b16 %v543
        %v559 = vunpack.c.l.b16 %v544
        %v560 = vunpack.c.l.b16 %v545
        %v561 = vunpack.c.l.b16 %v546
        %v562 = vpack.c.b16 %v559, %v558
        %v563 = vpack.c.b16 %v561, %v560
        %v567 = vsel %vm498, %v542, 0
        %569 = vmatprep.subr.bf16.mxu0 0
        %570 = vmatpush1.bf16.msra.mxu0 0
        %571 = vmatprep.subr.bf16.mxu0 0
        %572 = vmatpush1.bf16.msra.mxu0 0
        %573 = vmatprep.subr.bf16.mxu0 0
        %574 = vmatpush1.bf16.msra.mxu0 0
        %575 = vmatprep.subr.bf16.mxu0 0
        %576 = vmatpush1.bf16.msra.mxu0 0
        %577 = vmatprep.subr.bf16.mxu0 0
        %578 = vmatpush1.bf16.msra.mxu0 0
        %579 = vmatprep.subr.bf16.mxu0 0
        %580 = vmatpush1.bf16.msra.mxu0 0
        %581 = vmatprep.subr.bf16.mxu0 0
        %582 = vmatpush1.bf16.msra.mxu0 %v563
        %583 = vmatprep.subr.bf16.mxu0 0
        %584 = vmatpush1.bf16.msra.mxu0 %v562
        %585 = vmatprep.subr.bf16.mxu0 0
        %586 = vmatpush2.bf16.msra.mxu0 0
        %587 = vmatprep.subr.bf16.mxu0 0
        %588 = vmatpush2.bf16.msra.mxu0 0
        %589 = vmatprep.subr.bf16.mxu0 0
        %590 = vmatpush2.bf16.msra.mxu0 0
        %591 = vmatprep.subr.bf16.mxu0 0
        %592 = vmatpush2.bf16.msra.mxu0 0
        %593 = vmatprep.subr.bf16.mxu0 0
        %594 = vmatpush2.bf16.msra.mxu0 0
        %595 = vmatprep.subr.bf16.mxu0 0
        %596 = vmatpush2.bf16.msra.mxu0 0
        %597 = vmatprep.subr.bf16.mxu0 0
        %598 = vmatpush2.bf16.msra.mxu0 0
        %599 = vmatprep.subr.bf16.mxu0 0
        %600 = vmatpush2.bf16.msra.mxu0 0
        %601 = vmatprep.mubr.bf16.mxu0 0
        %602 = vmatmul.mubr.bf16.gmra.mxu0 %v567
        %v603 = vpop.f32.mrf.mxu0
        %v604 = vadd.f32 %v552, %v603
        %v605 = vpop.f32.mrf.mxu0
        %v606 = vpop.f32.mrf.mxu0
        %v607 = vadd.f32 %v552, %v606
        %v608 = vpop.f32.mrf.mxu0
        %609 = vdwg.mxu0
        %v610 = vld [vmem:[#allocation7] sm:$0xf]
        %v611 = vld [vmem:[#allocation7 + $0x4] sm:$0xf]
        %v612 = vld [vmem:[#allocation7 + $0x8] sm:$0xf]
        %v613 = vld [vmem:[#allocation7 + $0xc] sm:$0xf]
        %v614 = vld [vmem:[%s6] sm:$0x1]
        %v616 = vlaneseq
        %v617 = vshrl.u32 %v616, 7
        %v618 = vsub.s32 0, %v617
        %v619 = vrot.slane %v614, %v618
        %v625 = vunpack.c.l.b16 %v610
        %v626 = vunpack.c.l.b16 %v611
        %v627 = vunpack.c.l.b16 %v612
        %v628 = vunpack.c.l.b16 %v613
        %v629 = vpack.c.b16 %v626, %v625
        %v630 = vpack.c.b16 %v628, %v627
        %633 = vmatprep.subr.bf16.mxu0 0
        %634 = vmatpush1.bf16.msra.mxu0 0
        %635 = vmatprep.subr.bf16.mxu0 0
        %636 = vmatpush1.bf16.msra.mxu0 0
        %637 = vmatprep.subr.bf16.mxu0 0
        %638 = vmatpush1.bf16.msra.mxu0 0
        %639 = vmatprep.subr.bf16.mxu0 0
        %640 = vmatpush1.bf16.msra.mxu0 0
        %641 = vmatprep.subr.bf16.mxu0 0
        %642 = vmatpush1.bf16.msra.mxu0 0
        %643 = vmatprep.subr.bf16.mxu0 0
        %644 = vmatpush1.bf16.msra.mxu0 0
        %645 = vmatprep.subr.bf16.mxu0 0
        %646 = vmatpush1.bf16.msra.mxu0 %v630
        %647 = vmatprep.subr.bf16.mxu0 0
        %648 = vmatpush1.bf16.msra.mxu0 %v629
        %649 = vmatprep.subr.bf16.mxu0 0
        %650 = vmatpush2.bf16.msra.mxu0 0
        %651 = vmatprep.subr.bf16.mxu0 0
        %652 = vmatpush2.bf16.msra.mxu0 0
        %653 = vmatprep.subr.bf16.mxu0 0
        %654 = vmatpush2.bf16.msra.mxu0 0
        %655 = vmatprep.subr.bf16.mxu0 0
        %656 = vmatpush2.bf16.msra.mxu0 0
        %657 = vmatprep.subr.bf16.mxu0 0
        %658 = vmatpush2.bf16.msra.mxu0 0
        %659 = vmatprep.subr.bf16.mxu0 0
        %660 = vmatpush2.bf16.msra.mxu0 0
        %661 = vmatprep.subr.bf16.mxu0 0
        %662 = vmatpush2.bf16.msra.mxu0 0
        %663 = vmatprep.subr.bf16.mxu0 0
        %664 = vmatpush2.bf16.msra.mxu0 0
        %665 = vmatprep.mubr.bf16.mxu0 0
        %666 = vmatmul.mubr.bf16.gmra.mxu0 %v567
        %v667 = vpop.f32.mrf.mxu0
        %v668 = vadd.f32 %v619, %v667
        %v669 = vpop.f32.mrf.mxu0
        %v670 = vpop.f32.mrf.mxu0
        %v671 = vadd.f32 %v619, %v670
        %v672 = vpop.f32.mrf.mxu0
        %673 = vdwg.mxu0
        %v674 = vld [vmem:[#allocation8] sm:$0xf]
        %v675 = vld [vmem:[#allocation8 + $0x4] sm:$0xf]
        %v676 = vld [vmem:[#allocation8 + $0x8] sm:$0xf]
        %v677 = vld [vmem:[#allocation8 + $0xc] sm:$0xf]
        %v678 = vld [vmem:[%s8] sm:$0x1]
        %v680 = vlaneseq
        %v681 = vshrl.u32 %v680, 7
        %v682 = vsub.s32 0, %v681
        %v683 = vrot.slane %v678, %v682
        %v689 = vunpack.c.l.b16 %v674
        %v690 = vunpack.c.l.b16 %v675
        %v691 = vunpack.c.l.b16 %v676
        %v692 = vunpack.c.l.b16 %v677
        %v693 = vpack.c.b16 %v690, %v689
        %v694 = vpack.c.b16 %v692, %v691
        %697 = vmatprep.subr.bf16.mxu0 0
        %698 = vmatpush1.bf16.msra.mxu0 0
        %699 = vmatprep.subr.bf16.mxu0 0
        %700 = vmatpush1.bf16.msra.mxu0 0
        %701 = vmatprep.subr.bf16.mxu0 0
        %702 = vmatpush1.bf16.msra.mxu0 0
        %703 = vmatprep.subr.bf16.mxu0 0
        %704 = vmatpush1.bf16.msra.mxu0 0
        %705 = vmatprep.subr.bf16.mxu0 0
        %706 = vmatpush1.bf16.msra.mxu0 0
        %707 = vmatprep.subr.bf16.mxu0 0
        %708 = vmatpush1.bf16.msra.mxu0 0
        %709 = vmatprep.subr.bf16.mxu0 0
        %710 = vmatpush1.bf16.msra.mxu0 %v694
        %711 = vmatprep.subr.bf16.mxu0 0
        %712 = vmatpush1.bf16.msra.mxu0 %v693
        %713 = vmatprep.subr.bf16.mxu0 0
        %714 = vmatpush2.bf16.msra.mxu0 0
        %715 = vmatprep.subr.bf16.mxu0 0
        %716 = vmatpush2.bf16.msra.mxu0 0
        %717 = vmatprep.subr.bf16.mxu0 0
        %718 = vmatpush2.bf16.msra.mxu0 0
        %719 = vmatprep.subr.bf16.mxu0 0
        %720 = vmatpush2.bf16.msra.mxu0 0
        %721 = vmatprep.subr.bf16.mxu0 0
        %722 = vmatpush2.bf16.msra.mxu0 0
        %723 = vmatprep.subr.bf16.mxu0 0
        %724 = vmatpush2.bf16.msra.mxu0 0
        %725 = vmatprep.subr.bf16.mxu0 0
        %726 = vmatpush2.bf16.msra.mxu0 0
        %727 = vmatprep.subr.bf16.mxu0 0
        %728 = vmatpush2.bf16.msra.mxu0 0
        %729 = vmatprep.mubr.bf16.mxu0 0
        %730 = vmatmul.mubr.bf16.gmra.mxu0 %v567
        %v731 = vpop.f32.mrf.mxu0
        %v732 = vadd.f32 %v683, %v731
        %v733 = vpop.f32.mrf.mxu0
        %v734 = vpop.f32.mrf.mxu0
        %v735 = vadd.f32 %v683, %v734
        %v736 = vpop.f32.mrf.mxu0
        %737 = vdwg.mxu0
        %v738 = vmul.f32 %v604, 0.25
        %v739 = vmul.f32 %v607, 0.25
        %v740 = vpack.c.bf16 %v739, %v738
        %v742 = vunpack.c.l.b16 %v740
        %v743 = vunpack.c.h.b16 %v740
        %v744 = vpack.c.b16 %v742, %v742
        %v745 = vpack.c.b16 %v743, %v743
        %vm748 = vcmask 257024
        %749 = vst.msk [vmem:[%s474] sm:$0xf] %vm748, %v744
        %750 = vst.msk [vmem:[%s474 + $0x4] sm:$0xf] %vm748, %v745
        %v751 = vpack.c.bf16 %v671, %v668
        %v753 = vunpack.c.l.b16 %v751
        %v754 = vunpack.c.h.b16 %v751
        %v755 = vpack.c.b16 %v753, %v753
        %v756 = vpack.c.b16 %v754, %v754
        %759 = vst.msk [vmem:[%s481] sm:$0xf] %vm748, %v755
        %760 = vst.msk [vmem:[%s481 + $0x4] sm:$0xf] %vm748, %v756
        %v761 = vpack.c.bf16 %v735, %v732
        %v763 = vunpack.c.l.b16 %v761
        %v764 = vunpack.c.h.b16 %v761
        %v765 = vpack.c.b16 %v763, %v763
        %v766 = vpack.c.b16 %v764, %v764
        %769 = vst.msk [vmem:[%s488] sm:$0xf] %vm748, %v765
        %770 = vst.msk [vmem:[%s488 + $0x4] sm:$0xf] %vm748, %v766
        %s771 = sand.u32 %s252, 1
        %s772 = scalar_lea.sflag [#allocation4], %s771
        %s773 = sand.u32 %s252, 1
        %s774 = smul.addr %s773, 8
        %s775 = scalar_lea.vmem [#allocation10], %s774
        %s776 = sand.u32 %s34, 1
        %s777 = scalar_lea.sflag [#allocation12], %s776
        %s778 = sand.u32 %s280, 1
        %s779 = smul.addr %s778, 8
        %s780 = scalar_lea.vmem [#allocation11], %s779
        %s781 = sand.u32 %s34, 1
        %s782 = scalar_lea.sflag [#allocation12], %s781
        %s783 = sand.u32 %s308, 1
        %s784 = smul.addr %s783, 8
        %s785 = scalar_lea.vmem [#allocation13], %s784
        // Predicated region
        $region73: #{tpu_custom_call.1} parent=55 // pred_check
          %p786 = pneg %p262
        $region74: #{tpu_custom_call.1} parent=55 // pred_check_branch
          %788 = sbr.rel (%p786) target = $region76
        $region75: #{tpu_custom_call.1} parent=55 // pred_region
          %s789 = smul.u32 2, %s39
          %s791 = ssub.s32 128, 128
          %792 = vsyncadd %s772, %s791
          %s793 = smul.addr %s38, 4
          %s794 = sadd.s32 %s789, %s793
          %s795 = smul.addr %s794, 64
          %s796 = scalar_lea.hbm %s9, %s795
          %s797 = sshll.u32 %s775, 4
          %s798 = int_to_ptr.vmem [resolvable:$true] %s797
          %803 = dma.vmem_to_hbm [thread:$0]  %s798, 128, %s796, %s772, 64, 64, 4
        $region76: #{tpu_custom_call.1} parent=55 // pred_fallthru
          _
        // Predicated region
        $region77: #{tpu_custom_call.1} parent=55 // pred_check
          %p804 = pneg %p290
        $region78: #{tpu_custom_call.1} parent=55 // pred_check_branch
          %806 = sbr.rel (%p804) target = $region80
        $region79: #{tpu_custom_call.1} parent=55 // pred_region
          %s807 = smul.u32 2, %s39
          %s809 = ssub.s32 128, 128
          %810 = vsyncadd %s777, %s809
          %s811 = smul.addr %s38, 4
          %s812 = sadd.s32 %s807, %s811
          %s813 = smul.addr %s812, 64
          %s814 = scalar_lea.hbm %s10, %s813
          %s815 = sshll.u32 %s780, 4
          %s816 = int_to_ptr.vmem [resolvable:$true] %s815
          %821 = dma.vmem_to_hbm [thread:$0]  %s816, 128, %s814, %s777, 64, 64, 4
        $region80: #{tpu_custom_call.1} parent=55 // pred_fallthru
          _
        // Predicated region
        $region81: #{tpu_custom_call.1} parent=55 // pred_check
          %p822 = pneg %p318
        $region82: #{tpu_custom_call.1} parent=55 // pred_check_branch
          %824 = sbr.rel (%p822) target = $region84
        $region83: #{tpu_custom_call.1} parent=55 // pred_region
          %s825 = smul.u32 2, %s39
          %s827 = ssub.s32 128, 128
          %828 = vsyncadd %s782, %s827
          %s829 = smul.addr %s38, 4
          %s830 = sadd.s32 %s825, %s829
          %s831 = smul.addr %s830, 64
          %s832 = scalar_lea.hbm %s11, %s831
          %s833 = sshll.u32 %s785, 4
          %s834 = int_to_ptr.vmem [resolvable:$true] %s833
          %839 = dma.vmem_to_hbm [thread:$0]  %s834, 128, %s832, %s782, 64, 64, 4
        $region84: #{tpu_custom_call.1} parent=55 // pred_fallthru
          _
      $region56: #{tpu_custom_call.1} parent=5 // pred_fallthru
        _
      %p840 = scmp.le.s32.totalorder 2, %s29
      // Predicated region
      $region85: #{tpu_custom_call.1} parent=5 // pred_check
        %p841 = pneg %p840
      $region86: #{tpu_custom_call.1} parent=5 // pred_check_branch
        %843 = sbr.rel (%p841) target = $region88
      $region87: #{tpu_custom_call.1} parent=5 // pred_region
        %s844 = ssub.s32 %s29, 2
        // Predicated region
        $region89: #{tpu_custom_call.1} parent=87 // pred_check
          %p845 = pneg %p268
        $region90: #{tpu_custom_call.1} parent=87 // pred_check_branch
          %847 = sbr.rel (%p845) target = $region92
        $region91: #{tpu_custom_call.1} parent=87 // pred_region
          %s848 = sand.u32 %s253, 1
          %s849 = scalar_lea.sflag [#allocation4], %s848
          %s850 = sand.u32 %s253, 1
          %s851 = smul.addr %s850, 8
          %s852 = scalar_lea.vmem [#allocation10], %s851
          %853 = dma.done %s849, 128
        $region92: #{tpu_custom_call.1} parent=87 // pred_fallthru
          _
        // Predicated region
        $region93: #{tpu_custom_call.1} parent=87 // pred_check
          %p854 = pneg %p296
        $region94: #{tpu_custom_call.1} parent=87 // pred_check_branch
          %856 = sbr.rel (%p854) target = $region96
        $region95: #{tpu_custom_call.1} parent=87 // pred_region
          %s857 = sand.u32 %s35, 1
          %s858 = scalar_lea.sflag [#allocation12], %s857
          %s859 = sand.u32 %s281, 1
          %s860 = smul.addr %s859, 8
          %s861 = scalar_lea.vmem [#allocation11], %s860
          %862 = dma.done %s858, 128
        $region96: #{tpu_custom_call.1} parent=87 // pred_fallthru
          _
        // Predicated region
        $region97: #{tpu_custom_call.1} parent=87 // pred_check
          %p863 = pneg %p324
        $region98: #{tpu_custom_call.1} parent=87 // pred_check_branch
          %865 = sbr.rel (%p863) target = $region100
        $region99: #{tpu_custom_call.1} parent=87 // pred_region
          %s866 = sand.u32 %s35, 1
          %s867 = scalar_lea.sflag [#allocation12], %s866
          %s868 = sand.u32 %s309, 1
          %s869 = smul.addr %s868, 8
          %s870 = scalar_lea.vmem [#allocation13], %s869
          %871 = dma.done %s867, 128
        $region100: #{tpu_custom_call.1} parent=87 // pred_fallthru
          _
      $region88: #{tpu_custom_call.1} parent=5 // pred_fallthru
        _
    $region6: #{tpu_custom_call.1} parent=1 // loop_footer
      %s33 = sadd.s32 1, %s29
    $region7: #{tpu_custom_call.1} parent=1 // loop_footer_branch
      %28 = sbr.rel target = $region3
    $region8: #{tpu_custom_call.1} parent=1 // loop_exit
      _
    %872 = vsyncpa [#allocation3], 1
    %s873 = scalar_lea.sflag [#allocation3], 1
    %874 = vsyncpa %s873, 1
    %875 = vsyncpa [#allocation6], 1
    %876 = vsyncpa [#allocation9], 1
    %877 = vsyncpa [#allocation4], 1
    %s878 = scalar_lea.sflag [#allocation4], 1
    %879 = vsyncpa %s878, 1
    %880 = vsyncpa [#allocation12], 1
    %s881 = scalar_lea.sflag [#allocation12], 1
    %882 = vsyncpa %s881, 1

</llo_original>
